<compile_context>
chip_gen: v7x
topology: tpu7x:2x2x1
jax: 0.10.0
libtpu: 0.0.40
codegen_flags: <defaults>
</compile_context>

<pallas_src>
import jax
import jax.numpy as jnp
from jax import lax
from jax.experimental import pallas as pl
from jax.experimental.pallas import tpu as pltpu


def lstm_kernel(x_ref, wih_ref, whh_ref, b_ref, wfc0_ref, bfc0_ref,
                out_ref, xg_sc, h_sc, c_sc):
    """Full recurrent LSTM loop + final (scalar) FC output inside one kernel.

    x_ref    : (seq, input)        VMEM
    wih_ref  : (input, 4*hidden)   VMEM
    whh_ref  : (hidden, 4*hidden)  VMEM
    b_ref    : (1, 4*hidden)       VMEM   (b_ih + b_hh)
    wfc0_ref : (1, hidden)         VMEM   (row 0 of the FC weight)
    bfc0_ref : (1, 1)              VMEM   (FC bias, element 0)
    out_ref  : (1, 1)              VMEM   (the scalar out[-1][0])
    xg_sc    : (seq, 4*hidden)     scratch — precomputed input projection
    h_sc/c_sc: (1, hidden)         scratch — recurrent state
    """
    seq = x_ref.shape[0]
    hidden = h_sc.shape[1]

    # ---- hoisted out of the recurrence ------------------------------------
    # Input projection + combined bias for ALL timesteps: one batched matmul.
    xg_sc[...] = (jnp.dot(x_ref[...], wih_ref[...],
                          preferred_element_type=jnp.float32)
                  + b_ref[...])

    # Loop-invariant recurrent weight (kept in vregs across the unrolled loop).
    whh = whh_ref[...]                                   # (hidden, 4*hidden)

    # Single full-width tanh replaces 3 sigmoids + 1 tanh per step:
    #   sigmoid(x) = 0.5 * tanh(0.5 * x) + 0.5
    # Lanes [2H, 3H) are the candidate gate g (plain tanh); all other lanes
    # are sigmoid gates (i, f, o).
    lane = lax.broadcasted_iota(jnp.int32, (1, 4 * hidden), 1)
    is_g = (lane >= 2 * hidden) & (lane < 3 * hidden)
    pre = jnp.where(is_g, jnp.float32(1.0), jnp.float32(0.5))
    post_mul = pre                                        # 1.0 for g, 0.5 otherwise
    post_add = jnp.where(is_g, jnp.float32(0.0), jnp.float32(0.5))

    # h0 = c0 = zeros, exactly as in the PyTorch module.
    h_sc[...] = jnp.zeros_like(h_sc)
    c_sc[...] = jnp.zeros_like(c_sc)

    def step(t, carry):
        h = h_sc[...]                                     # (1, hidden)
        c = c_sc[...]                                     # (1, hidden)

        gates = (xg_sc[pl.ds(t, 1), :]
                 + jnp.dot(h, whh, preferred_element_type=jnp.float32))

        # One full-width (1, 4H) tanh on the EUP, then a cheap VPU affine.
        acts = jnp.tanh(gates * pre) * post_mul + post_add
        i = acts[:, 0 * hidden:1 * hidden]
        f = acts[:, 1 * hidden:2 * hidden]
        g = acts[:, 2 * hidden:3 * hidden]
        o = acts[:, 3 * hidden:4 * hidden]

        c_new = f * c + i * g
        h_new = o * jnp.tanh(c_new)

        c_sc[...] = c_new
        h_sc[...] = h_new
        return carry

    # seq is static and small: fully unroll so the scheduler sees across steps.
    lax.fori_loop(0, seq, step, 0, unroll=True)

    # Only out[-1][0] is consumed by the module's forward():
    #   out[-1, 0] = h_last . w_fc[0, :] + b_fc[0]
    out_ref[...] = (jnp.sum(h_sc[...] * wfc0_ref[...], axis=-1, keepdims=True)
                    + bfc0_ref[...])


def lstm_forward(x, w_ih, w_hh, b_ih, b_hh, w_fc, b_fc):
    """Pallas-backed equivalent of LSTM.forward(x); returns a scalar."""
    seq, _ = x.shape
    hidden = w_hh.shape[1]

    # Glue: transpose / fold weights once so the kernel does row-major matmuls.
    wih_t = jnp.asarray(w_ih.T, jnp.float32)              # (input, 4H)
    whh_t = jnp.asarray(w_hh.T, jnp.float32)              # (hidden, 4H)
    b = jnp.asarray((b_ih + b_hh).reshape(1, -1), jnp.float32)   # (1, 4H)
    wfc0 = jnp.asarray(w_fc[0:1, :], jnp.float32)          # (1, hidden)
    bfc0 = jnp.asarray(b_fc[0:1].reshape(1, 1), jnp.float32)     # (1, 1)

    out = pl.pallas_call(
        lstm_kernel,
        out_shape=jax.ShapeDtypeStruct((1, 1), jnp.float32),
        in_specs=[pl.BlockSpec(memory_space=pltpu.MemorySpace.VMEM)] * 6,
        out_specs=pl.BlockSpec(memory_space=pltpu.MemorySpace.VMEM),
        scratch_shapes=[
            pltpu.VMEM((seq, 4 * hidden), jnp.float32),    # xg = x @ W_ih^T + b
            pltpu.VMEM((1, hidden), jnp.float32),          # h
            pltpu.VMEM((1, hidden), jnp.float32),          # c
        ],
    )(jnp.asarray(x, jnp.float32), wih_t, whh_t, b, wfc0, bfc0)

    return out[0, 0]                                       # scalar, like out[-1][0]


def lstm_reference(x, w_ih, w_hh, b_ih, b_hh, w_fc, b_fc):
    """Pure-JAX reference implementing PyTorch nn.LSTM + Linear semantics."""
    hidden = w_hh.shape[1]
    h = jnp.zeros((1, hidden), jnp.float32)
    c = jnp.zeros((1, hidden), jnp.float32)

    def step(carry, x_t):
        h, c = carry
        gates = x_t[None, :] @ w_ih.T + b_ih + h @ w_hh.T + b_hh
        i = jax.nn.sigmoid(gates[:, 0 * hidden:1 * hidden])
        f = jax.nn.sigmoid(gates[:, 1 * hidden:2 * hidden])
        g = jnp.tanh(gates[:, 2 * hidden:3 * hidden])
        o = jax.nn.sigmoid(gates[:, 3 * hidden:4 * hidden])
        c = f * c + i * g
        h = o * jnp.tanh(c)
        return (h, c), h[0]

    (_, _), hs = lax.scan(step, (h, c), x)
    out = hs @ w_fc.T + b_fc
    return out[-1, 0]


if __name__ == "__main__":
    # Small shapes implied by the module: x is (seq_len, input_size).
    seq_len = 8
    input_size = 16
    hidden_size = 32
    output_size = 4

    key = jax.random.PRNGKey(0)
    kx, k1, k2, k3, k4, k5, k6 = jax.random.split(key, 7)

    # Deterministic parameter init (PyTorch-style uniform(-1/sqrt(H), 1/sqrt(H))).
    k = 1.0 / jnp.sqrt(jnp.float32(hidden_size))
    w_ih = jax.random.uniform(k1, (4 * hidden_size, input_size), jnp.float32, -k, k)
    w_hh = jax.random.uniform(k2, (4 * hidden_size, hidden_size), jnp.float32, -k, k)
    b_ih = jax.random.uniform(k3, (4 * hidden_size,), jnp.float32, -k, k)
    b_hh = jax.random.uniform(k4, (4 * hidden_size,), jnp.float32, -k, k)
    w_fc = jax.random.uniform(k5, (output_size, hidden_size), jnp.float32, -k, k)
    b_fc = jax.random.uniform(k6, (output_size,), jnp.float32, -k, k)

    x = jax.random.normal(kx, (seq_len, input_size), jnp.float32)

    # TODO(synk): the PyTorch module carries (h0, c0) across forward() calls;
    # this kernel models a single call starting from the module's zero buffers.
    result = lstm_forward(x, w_ih, w_hh, b_ih, b_hh, w_fc, b_fc)
    result = jax.block_until_ready(result)

    ref = lstm_reference(x, w_ih, w_hh, b_ih, b_hh, w_fc, b_fc)
    assert jnp.allclose(result, ref, atol=1e-5, rtol=1e-5), (result, ref)

    print("KERNEL_OK")
</pallas_src>

<mosaic_0001>
module attributes {stable_mosaic.version = 11 : i64} {
  func.func @lstm_kernel(%arg0: memref<8x16xf32, #tpu.memory_space<vmem>>, %arg1: memref<16x128xf32, #tpu.memory_space<vmem>>, %arg2: memref<32x128xf32, #tpu.memory_space<vmem>>, %arg3: memref<1x128xf32, #tpu.memory_space<vmem>>, %arg4: memref<1x32xf32, #tpu.memory_space<vmem>>, %arg5: memref<1x1xf32, #tpu.memory_space<vmem>>, %arg6: memref<1x1xf32, #tpu.memory_space<vmem>>, %arg7: memref<8x128xf32, #tpu.memory_space<vmem>>, %arg8: memref<1x32xf32, #tpu.memory_space<vmem>>, %arg9: memref<1x32xf32, #tpu.memory_space<vmem>>) attributes {dimension_semantics = [], scalar_prefetch = 0 : i64, scratch_operands = 3 : i64, tpu.core_type = #tpu.core_type<tc>} {
    %c0 = arith.constant 0 : index
    %c0_0 = arith.constant 0 : index
    %0 = vector.load %arg0[%c0, %c0_0] : memref<8x16xf32, #tpu.memory_space<vmem>>, vector<8x16xf32>
    %c0_1 = arith.constant 0 : index
    %c0_2 = arith.constant 0 : index
    %1 = vector.load %arg1[%c0_1, %c0_2] : memref<16x128xf32, #tpu.memory_space<vmem>>, vector<16x128xf32>
    %cst = arith.constant dense<0.000000e+00> : vector<8x128xf32>
    %2 = tpu.matmul %0, %1, %cst {dimension_numbers = #tpu.dot_dimension_numbers<[1], [0], [0], [1], [0, 0, 1, 1], [], []>} : vector<8x16xf32>, vector<16x128xf32>, vector<8x128xf32> -> vector<8x128xf32>
    %c0_3 = arith.constant 0 : index
    %c0_4 = arith.constant 0 : index
    %3 = vector.load %arg3[%c0_3, %c0_4] : memref<1x128xf32, #tpu.memory_space<vmem>>, vector<1x128xf32>
    %4 = vector.broadcast %3 : vector<1x128xf32> to vector<8x128xf32>
    %5 = arith.addf %2, %4 : vector<8x128xf32>
    %c0_5 = arith.constant 0 : index
    %c0_6 = arith.constant 0 : index
    %6 = vector.load %arg7[%c0_5, %c0_6] : memref<8x128xf32, #tpu.memory_space<vmem>>, vector<8x128xf32>
    tpu.vector_store %arg7[%c0_5, %c0_6], %5 {strides = array<i32>} : memref<8x128xf32, #tpu.memory_space<vmem>>, vector<8x128xf32>,
    %c0_7 = arith.constant 0 : index
    %c0_8 = arith.constant 0 : index
    %7 = vector.load %arg2[%c0_7, %c0_8] : memref<32x128xf32, #tpu.memory_space<vmem>>, vector<32x128xf32>
    %8 = tpu.iota {dimensions = array<i32: 1>} : vector<1x128xi32>
    %c64_i32 = arith.constant 64 : i32
    %9 = vector.broadcast %c64_i32 : i32 to vector<1x128xi32>
    %10 = arith.cmpi sge, %8, %9 : vector<1x128xi32>
    %c96_i32 = arith.constant 96 : i32
    %11 = vector.broadcast %c96_i32 : i32 to vector<1x128xi32>
    %12 = arith.cmpi slt, %8, %11 : vector<1x128xi32>
    %13 = arith.andi %10, %12 : vector<1x128xi1>
    %cst_9 = arith.constant 1.000000e+00 : f32
    %cst_10 = arith.constant 5.000000e-01 : f32
    %14 = vector.broadcast %cst_9 : f32 to vector<1x128xf32>
    %15 = vector.broadcast %cst_10 : f32 to vector<1x128xf32>
    %16 = arith.select %13, %14, %15 : vector<1x128xi1>, vector<1x128xf32>
    %cst_11 = arith.constant 0.000000e+00 : f32
    %cst_12 = arith.constant 5.000000e-01 : f32
    %17 = vector.broadcast %cst_11 : f32 to vector<1x128xf32>
    %18 = vector.broadcast %cst_12 : f32 to vector<1x128xf32>
    %19 = arith.select %13, %17, %18 : vector<1x128xi1>, vector<1x128xf32>
    %cst_13 = arith.constant 0.000000e+00 : f32
    %20 = vector.broadcast %cst_13 : f32 to vector<1x32xf32>
    %c0_14 = arith.constant 0 : index
    %c0_15 = arith.constant 0 : index
    %21 = vector.load %arg8[%c0_14, %c0_15] : memref<1x32xf32, #tpu.memory_space<vmem>>, vector<1x32xf32>
    tpu.vector_store %arg8[%c0_14, %c0_15], %20 {strides = array<i32>} : memref<1x32xf32, #tpu.memory_space<vmem>>, vector<1x32xf32>,
    %cst_16 = arith.constant 0.000000e+00 : f32
    %22 = vector.broadcast %cst_16 : f32 to vector<1x32xf32>
    %c0_17 = arith.constant 0 : index
    %c0_18 = arith.constant 0 : index
    %23 = vector.load %arg9[%c0_17, %c0_18] : memref<1x32xf32, #tpu.memory_space<vmem>>, vector<1x32xf32>
    tpu.vector_store %arg9[%c0_17, %c0_18], %22 {strides = array<i32>} : memref<1x32xf32, #tpu.memory_space<vmem>>, vector<1x32xf32>,
    %c0_i32 = arith.constant 0 : i32
    %c0_19 = arith.constant 0 : index
    %c0_20 = arith.constant 0 : index
    %24 = vector.load %arg8[%c0_19, %c0_20] : memref<1x32xf32, #tpu.memory_space<vmem>>, vector<1x32xf32>
    %c0_21 = arith.constant 0 : index
    %c0_22 = arith.constant 0 : index
    %25 = vector.load %arg9[%c0_21, %c0_22] : memref<1x32xf32, #tpu.memory_space<vmem>>, vector<1x32xf32>
    %26 = arith.index_cast %c0_i32 : i32 to index
    %c0_23 = arith.constant 0 : index
    %27 = vector.load %arg7[%26, %c0_23] : memref<8x128xf32, #tpu.memory_space<vmem>>, vector<1x128xf32>
    %cst_24 = arith.constant dense<0.000000e+00> : vector<1x128xf32>
    %28 = tpu.matmul %24, %7, %cst_24 {dimension_numbers = #tpu.dot_dimension_numbers<[1], [0], [0], [1], [0, 0, 1, 1], [], []>} : vector<1x32xf32>, vector<32x128xf32>, vector<1x128xf32> -> vector<1x128xf32>
    %29 = arith.addf %27, %28 : vector<1x128xf32>
    %30 = arith.mulf %29, %16 : vector<1x128xf32>
    %31 = math.tanh %30 : vector<1x128xf32>
    %32 = arith.mulf %31, %16 : vector<1x128xf32>
    %33 = arith.addf %32, %19 : vector<1x128xf32>
    %34 = vector.extract_strided_slice %33 {offsets = [0, 0], sizes = [1, 32], strides = [1, 1]} : vector<1x128xf32> to vector<1x32xf32>
    %35 = vector.extract_strided_slice %33 {offsets = [0, 32], sizes = [1, 32], strides = [1, 1]} : vector<1x128xf32> to vector<1x32xf32>
    %36 = vector.extract_strided_slice %33 {offsets = [0, 64], sizes = [1, 32], strides = [1, 1]} : vector<1x128xf32> to vector<1x32xf32>
    %37 = vector.extract_strided_slice %33 {offsets = [0, 96], sizes = [1, 32], strides = [1, 1]} : vector<1x128xf32> to vector<1x32xf32>
    %38 = arith.mulf %35, %25 : vector<1x32xf32>
    %39 = arith.mulf %34, %36 : vector<1x32xf32>
    %40 = arith.addf %38, %39 : vector<1x32xf32>
    %41 = math.tanh %40 : vector<1x32xf32>
    %42 = arith.mulf %37, %41 : vector<1x32xf32>
    %c0_25 = arith.constant 0 : index
    %c0_26 = arith.constant 0 : index
    %43 = vector.load %arg9[%c0_25, %c0_26] : memref<1x32xf32, #tpu.memory_space<vmem>>, vector<1x32xf32>
    tpu.vector_store %arg9[%c0_25, %c0_26], %40 {strides = array<i32>} : memref<1x32xf32, #tpu.memory_space<vmem>>, vector<1x32xf32>,
    %c0_27 = arith.constant 0 : index
    %c0_28 = arith.constant 0 : index
    %44 = vector.load %arg8[%c0_27, %c0_28] : memref<1x32xf32, #tpu.memory_space<vmem>>, vector<1x32xf32>
    tpu.vector_store %arg8[%c0_27, %c0_28], %42 {strides = array<i32>} : memref<1x32xf32, #tpu.memory_space<vmem>>, vector<1x32xf32>,
    %c1_i32 = arith.constant 1 : i32
    %c0_29 = arith.constant 0 : index
    %c0_30 = arith.constant 0 : index
    %45 = vector.load %arg8[%c0_29, %c0_30] : memref<1x32xf32, #tpu.memory_space<vmem>>, vector<1x32xf32>
    %c0_31 = arith.constant 0 : index
    %c0_32 = arith.constant 0 : index
    %46 = vector.load %arg9[%c0_31, %c0_32] : memref<1x32xf32, #tpu.memory_space<vmem>>, vector<1x32xf32>
    %47 = arith.index_cast %c1_i32 : i32 to index
    %c0_33 = arith.constant 0 : index
    %48 = vector.load %arg7[%47, %c0_33] : memref<8x128xf32, #tpu.memory_space<vmem>>, vector<1x128xf32>
    %cst_34 = arith.constant dense<0.000000e+00> : vector<1x128xf32>
    %49 = tpu.matmul %45, %7, %cst_34 {dimension_numbers = #tpu.dot_dimension_numbers<[1], [0], [0], [1], [0, 0, 1, 1], [], []>} : vector<1x32xf32>, vector<32x128xf32>, vector<1x128xf32> -> vector<1x128xf32>
    %50 = arith.addf %48, %49 : vector<1x128xf32>
    %51 = arith.mulf %50, %16 : vector<1x128xf32>
    %52 = math.tanh %51 : vector<1x128xf32>
    %53 = arith.mulf %52, %16 : vector<1x128xf32>
    %54 = arith.addf %53, %19 : vector<1x128xf32>
    %55 = vector.extract_strided_slice %54 {offsets = [0, 0], sizes = [1, 32], strides = [1, 1]} : vector<1x128xf32> to vector<1x32xf32>
    %56 = vector.extract_strided_slice %54 {offsets = [0, 32], sizes = [1, 32], strides = [1, 1]} : vector<1x128xf32> to vector<1x32xf32>
    %57 = vector.extract_strided_slice %54 {offsets = [0, 64], sizes = [1, 32], strides = [1, 1]} : vector<1x128xf32> to vector<1x32xf32>
    %58 = vector.extract_strided_slice %54 {offsets = [0, 96], sizes = [1, 32], strides = [1, 1]} : vector<1x128xf32> to vector<1x32xf32>
    %59 = arith.mulf %56, %46 : vector<1x32xf32>
    %60 = arith.mulf %55, %57 : vector<1x32xf32>
    %61 = arith.addf %59, %60 : vector<1x32xf32>
    %62 = math.tanh %61 : vector<1x32xf32>
    %63 = arith.mulf %58, %62 : vector<1x32xf32>
    %c0_35 = arith.constant 0 : index
    %c0_36 = arith.constant 0 : index
    %64 = vector.load %arg9[%c0_35, %c0_36] : memref<1x32xf32, #tpu.memory_space<vmem>>, vector<1x32xf32>
    tpu.vector_store %arg9[%c0_35, %c0_36], %61 {strides = array<i32>} : memref<1x32xf32, #tpu.memory_space<vmem>>, vector<1x32xf32>,
    %c0_37 = arith.constant 0 : index
    %c0_38 = arith.constant 0 : index
    %65 = vector.load %arg8[%c0_37, %c0_38] : memref<1x32xf32, #tpu.memory_space<vmem>>, vector<1x32xf32>
    tpu.vector_store %arg8[%c0_37, %c0_38], %63 {strides = array<i32>} : memref<1x32xf32, #tpu.memory_space<vmem>>, vector<1x32xf32>,
    %c2_i32 = arith.constant 2 : i32
    %c0_39 = arith.constant 0 : index
    %c0_40 = arith.constant 0 : index
    %66 = vector.load %arg8[%c0_39, %c0_40] : memref<1x32xf32, #tpu.memory_space<vmem>>, vector<1x32xf32>
    %c0_41 = arith.constant 0 : index
    %c0_42 = arith.constant 0 : index
    %67 = vector.load %arg9[%c0_41, %c0_42] : memref<1x32xf32, #tpu.memory_space<vmem>>, vector<1x32xf32>
    %68 = arith.index_cast %c2_i32 : i32 to index
    %c0_43 = arith.constant 0 : index
    %69 = vector.load %arg7[%68, %c0_43] : memref<8x128xf32, #tpu.memory_space<vmem>>, vector<1x128xf32>
    %cst_44 = arith.constant dense<0.000000e+00> : vector<1x128xf32>
    %70 = tpu.matmul %66, %7, %cst_44 {dimension_numbers = #tpu.dot_dimension_numbers<[1], [0], [0], [1], [0, 0, 1, 1], [], []>} : vector<1x32xf32>, vector<32x128xf32>, vector<1x128xf32> -> vector<1x128xf32>
    %71 = arith.addf %69, %70 : vector<1x128xf32>
    %72 = arith.mulf %71, %16 : vector<1x128xf32>
    %73 = math.tanh %72 : vector<1x128xf32>
    %74 = arith.mulf %73, %16 : vector<1x128xf32>
    %75 = arith.addf %74, %19 : vector<1x128xf32>
    %76 = vector.extract_strided_slice %75 {offsets = [0, 0], sizes = [1, 32], strides = [1, 1]} : vector<1x128xf32> to vector<1x32xf32>
    %77 = vector.extract_strided_slice %75 {offsets = [0, 32], sizes = [1, 32], strides = [1, 1]} : vector<1x128xf32> to vector<1x32xf32>
    %78 = vector.extract_strided_slice %75 {offsets = [0, 64], sizes = [1, 32], strides = [1, 1]} : vector<1x128xf32> to vector<1x32xf32>
    %79 = vector.extract_strided_slice %75 {offsets = [0, 96], sizes = [1, 32], strides = [1, 1]} : vector<1x128xf32> to vector<1x32xf32>
    %80 = arith.mulf %77, %67 : vector<1x32xf32>
    %81 = arith.mulf %76, %78 : vector<1x32xf32>
    %82 = arith.addf %80, %81 : vector<1x32xf32>
    %83 = math.tanh %82 : vector<1x32xf32>
    %84 = arith.mulf %79, %83 : vector<1x32xf32>
    %c0_45 = arith.constant 0 : index
    %c0_46 = arith.constant 0 : index
    %85 = vector.load %arg9[%c0_45, %c0_46] : memref<1x32xf32, #tpu.memory_space<vmem>>, vector<1x32xf32>
    tpu.vector_store %arg9[%c0_45, %c0_46], %82 {strides = array<i32>} : memref<1x32xf32, #tpu.memory_space<vmem>>, vector<1x32xf32>,
    %c0_47 = arith.constant 0 : index
    %c0_48 = arith.constant 0 : index
    %86 = vector.load %arg8[%c0_47, %c0_48] : memref<1x32xf32, #tpu.memory_space<vmem>>, vector<1x32xf32>
    tpu.vector_store %arg8[%c0_47, %c0_48], %84 {strides = array<i32>} : memref<1x32xf32, #tpu.memory_space<vmem>>, vector<1x32xf32>,
    %c3_i32 = arith.constant 3 : i32
    %c0_49 = arith.constant 0 : index
    %c0_50 = arith.constant 0 : index
    %87 = vector.load %arg8[%c0_49, %c0_50] : memref<1x32xf32, #tpu.memory_space<vmem>>, vector<1x32xf32>
    %c0_51 = arith.constant 0 : index
    %c0_52 = arith.constant 0 : index
    %88 = vector.load %arg9[%c0_51, %c0_52] : memref<1x32xf32, #tpu.memory_space<vmem>>, vector<1x32xf32>
    %89 = arith.index_cast %c3_i32 : i32 to index
    %c0_53 = arith.constant 0 : index
    %90 = vector.load %arg7[%89, %c0_53] : memref<8x128xf32, #tpu.memory_space<vmem>>, vector<1x128xf32>
    %cst_54 = arith.constant dense<0.000000e+00> : vector<1x128xf32>
    %91 = tpu.matmul %87, %7, %cst_54 {dimension_numbers = #tpu.dot_dimension_numbers<[1], [0], [0], [1], [0, 0, 1, 1], [], []>} : vector<1x32xf32>, vector<32x128xf32>, vector<1x128xf32> -> vector<1x128xf32>
    %92 = arith.addf %90, %91 : vector<1x128xf32>
    %93 = arith.mulf %92, %16 : vector<1x128xf32>
    %94 = math.tanh %93 : vector<1x128xf32>
    %95 = arith.mulf %94, %16 : vector<1x128xf32>
    %96 = arith.addf %95, %19 : vector<1x128xf32>
    %97 = vector.extract_strided_slice %96 {offsets = [0, 0], sizes = [1, 32], strides = [1, 1]} : vector<1x128xf32> to vector<1x32xf32>
    %98 = vector.extract_strided_slice %96 {offsets = [0, 32], sizes = [1, 32], strides = [1, 1]} : vector<1x128xf32> to vector<1x32xf32>
    %99 = vector.extract_strided_slice %96 {offsets = [0, 64], sizes = [1, 32], strides = [1, 1]} : vector<1x128xf32> to vector<1x32xf32>
    %100 = vector.extract_strided_slice %96 {offsets = [0, 96], sizes = [1, 32], strides = [1, 1]} : vector<1x128xf32> to vector<1x32xf32>
    %101 = arith.mulf %98, %88 : vector<1x32xf32>
    %102 = arith.mulf %97, %99 : vector<1x32xf32>
    %103 = arith.addf %101, %102 : vector<1x32xf32>
    %104 = math.tanh %103 : vector<1x32xf32>
    %105 = arith.mulf %100, %104 : vector<1x32xf32>
    %c0_55 = arith.constant 0 : index
    %c0_56 = arith.constant 0 : index
    %106 = vector.load %arg9[%c0_55, %c0_56] : memref<1x32xf32, #tpu.memory_space<vmem>>, vector<1x32xf32>
    tpu.vector_store %arg9[%c0_55, %c0_56], %103 {strides = array<i32>} : memref<1x32xf32, #tpu.memory_space<vmem>>, vector<1x32xf32>,
    %c0_57 = arith.constant 0 : index
    %c0_58 = arith.constant 0 : index
    %107 = vector.load %arg8[%c0_57, %c0_58] : memref<1x32xf32, #tpu.memory_space<vmem>>, vector<1x32xf32>
    tpu.vector_store %arg8[%c0_57, %c0_58], %105 {strides = array<i32>} : memref<1x32xf32, #tpu.memory_space<vmem>>, vector<1x32xf32>,
    %c4_i32 = arith.constant 4 : i32
    %c0_59 = arith.constant 0 : index
    %c0_60 = arith.constant 0 : index
    %108 = vector.load %arg8[%c0_59, %c0_60] : memref<1x32xf32, #tpu.memory_space<vmem>>, vector<1x32xf32>
    %c0_61 = arith.constant 0 : index
    %c0_62 = arith.constant 0 : index
    %109 = vector.load %arg9[%c0_61, %c0_62] : memref<1x32xf32, #tpu.memory_space<vmem>>, vector<1x32xf32>
    %110 = arith.index_cast %c4_i32 : i32 to index
    %c0_63 = arith.constant 0 : index
    %111 = vector.load %arg7[%110, %c0_63] : memref<8x128xf32, #tpu.memory_space<vmem>>, vector<1x128xf32>
    %cst_64 = arith.constant dense<0.000000e+00> : vector<1x128xf32>
    %112 = tpu.matmul %108, %7, %cst_64 {dimension_numbers = #tpu.dot_dimension_numbers<[1], [0], [0], [1], [0, 0, 1, 1], [], []>} : vector<1x32xf32>, vector<32x128xf32>, vector<1x128xf32> -> vector<1x128xf32>
    %113 = arith.addf %111, %112 : vector<1x128xf32>
    %114 = arith.mulf %113, %16 : vector<1x128xf32>
    %115 = math.tanh %114 : vector<1x128xf32>
    %116 = arith.mulf %115, %16 : vector<1x128xf32>
    %117 = arith.addf %116, %19 : vector<1x128xf32>
    %118 = vector.extract_strided_slice %117 {offsets = [0, 0], sizes = [1, 32], strides = [1, 1]} : vector<1x128xf32> to vector<1x32xf32>
    %119 = vector.extract_strided_slice %117 {offsets = [0, 32], sizes = [1, 32], strides = [1, 1]} : vector<1x128xf32> to vector<1x32xf32>
    %120 = vector.extract_strided_slice %117 {offsets = [0, 64], sizes = [1, 32], strides = [1, 1]} : vector<1x128xf32> to vector<1x32xf32>
    %121 = vector.extract_strided_slice %117 {offsets = [0, 96], sizes = [1, 32], strides = [1, 1]} : vector<1x128xf32> to vector<1x32xf32>
    %122 = arith.mulf %119, %109 : vector<1x32xf32>
    %123 = arith.mulf %118, %120 : vector<1x32xf32>
    %124 = arith.addf %122, %123 : vector<1x32xf32>
    %125 = math.tanh %124 : vector<1x32xf32>
    %126 = arith.mulf %121, %125 : vector<1x32xf32>
    %c0_65 = arith.constant 0 : index
    %c0_66 = arith.constant 0 : index
    %127 = vector.load %arg9[%c0_65, %c0_66] : memref<1x32xf32, #tpu.memory_space<vmem>>, vector<1x32xf32>
    tpu.vector_store %arg9[%c0_65, %c0_66], %124 {strides = array<i32>} : memref<1x32xf32, #tpu.memory_space<vmem>>, vector<1x32xf32>,
    %c0_67 = arith.constant 0 : index
    %c0_68 = arith.constant 0 : index
    %128 = vector.load %arg8[%c0_67, %c0_68] : memref<1x32xf32, #tpu.memory_space<vmem>>, vector<1x32xf32>
    tpu.vector_store %arg8[%c0_67, %c0_68], %126 {strides = array<i32>} : memref<1x32xf32, #tpu.memory_space<vmem>>, vector<1x32xf32>,
    %c5_i32 = arith.constant 5 : i32
    %c0_69 = arith.constant 0 : index
    %c0_70 = arith.constant 0 : index
    %129 = vector.load %arg8[%c0_69, %c0_70] : memref<1x32xf32, #tpu.memory_space<vmem>>, vector<1x32xf32>
    %c0_71 = arith.constant 0 : index
    %c0_72 = arith.constant 0 : index
    %130 = vector.load %arg9[%c0_71, %c0_72] : memref<1x32xf32, #tpu.memory_space<vmem>>, vector<1x32xf32>
    %131 = arith.index_cast %c5_i32 : i32 to index
    %c0_73 = arith.constant 0 : index
    %132 = vector.load %arg7[%131, %c0_73] : memref<8x128xf32, #tpu.memory_space<vmem>>, vector<1x128xf32>
    %cst_74 = arith.constant dense<0.000000e+00> : vector<1x128xf32>
    %133 = tpu.matmul %129, %7, %cst_74 {dimension_numbers = #tpu.dot_dimension_numbers<[1], [0], [0], [1], [0, 0, 1, 1], [], []>} : vector<1x32xf32>, vector<32x128xf32>, vector<1x128xf32> -> vector<1x128xf32>
    %134 = arith.addf %132, %133 : vector<1x128xf32>
    %135 = arith.mulf %134, %16 : vector<1x128xf32>
    %136 = math.tanh %135 : vector<1x128xf32>
    %137 = arith.mulf %136, %16 : vector<1x128xf32>
    %138 = arith.addf %137, %19 : vector<1x128xf32>
    %139 = vector.extract_strided_slice %138 {offsets = [0, 0], sizes = [1, 32], strides = [1, 1]} : vector<1x128xf32> to vector<1x32xf32>
    %140 = vector.extract_strided_slice %138 {offsets = [0, 32], sizes = [1, 32], strides = [1, 1]} : vector<1x128xf32> to vector<1x32xf32>
    %141 = vector.extract_strided_slice %138 {offsets = [0, 64], sizes = [1, 32], strides = [1, 1]} : vector<1x128xf32> to vector<1x32xf32>
    %142 = vector.extract_strided_slice %138 {offsets = [0, 96], sizes = [1, 32], strides = [1, 1]} : vector<1x128xf32> to vector<1x32xf32>
    %143 = arith.mulf %140, %130 : vector<1x32xf32>
    %144 = arith.mulf %139, %141 : vector<1x32xf32>
    %145 = arith.addf %143, %144 : vector<1x32xf32>
    %146 = math.tanh %145 : vector<1x32xf32>
    %147 = arith.mulf %142, %146 : vector<1x32xf32>
    %c0_75 = arith.constant 0 : index
    %c0_76 = arith.constant 0 : index
    %148 = vector.load %arg9[%c0_75, %c0_76] : memref<1x32xf32, #tpu.memory_space<vmem>>, vector<1x32xf32>
    tpu.vector_store %arg9[%c0_75, %c0_76], %145 {strides = array<i32>} : memref<1x32xf32, #tpu.memory_space<vmem>>, vector<1x32xf32>,
    %c0_77 = arith.constant 0 : index
    %c0_78 = arith.constant 0 : index
    %149 = vector.load %arg8[%c0_77, %c0_78] : memref<1x32xf32, #tpu.memory_space<vmem>>, vector<1x32xf32>
    tpu.vector_store %arg8[%c0_77, %c0_78], %147 {strides = array<i32>} : memref<1x32xf32, #tpu.memory_space<vmem>>, vector<1x32xf32>,
    %c6_i32 = arith.constant 6 : i32
    %c0_79 = arith.constant 0 : index
    %c0_80 = arith.constant 0 : index
    %150 = vector.load %arg8[%c0_79, %c0_80] : memref<1x32xf32, #tpu.memory_space<vmem>>, vector<1x32xf32>
    %c0_81 = arith.constant 0 : index
    %c0_82 = arith.constant 0 : index
    %151 = vector.load %arg9[%c0_81, %c0_82] : memref<1x32xf32, #tpu.memory_space<vmem>>, vector<1x32xf32>
    %152 = arith.index_cast %c6_i32 : i32 to index
    %c0_83 = arith.constant 0 : index
    %153 = vector.load %arg7[%152, %c0_83] : memref<8x128xf32, #tpu.memory_space<vmem>>, vector<1x128xf32>
    %cst_84 = arith.constant dense<0.000000e+00> : vector<1x128xf32>
    %154 = tpu.matmul %150, %7, %cst_84 {dimension_numbers = #tpu.dot_dimension_numbers<[1], [0], [0], [1], [0, 0, 1, 1], [], []>} : vector<1x32xf32>, vector<32x128xf32>, vector<1x128xf32> -> vector<1x128xf32>
    %155 = arith.addf %153, %154 : vector<1x128xf32>
    %156 = arith.mulf %155, %16 : vector<1x128xf32>
    %157 = math.tanh %156 : vector<1x128xf32>
    %158 = arith.mulf %157, %16 : vector<1x128xf32>
    %159 = arith.addf %158, %19 : vector<1x128xf32>
    %160 = vector.extract_strided_slice %159 {offsets = [0, 0], sizes = [1, 32], strides = [1, 1]} : vector<1x128xf32> to vector<1x32xf32>
    %161 = vector.extract_strided_slice %159 {offsets = [0, 32], sizes = [1, 32], strides = [1, 1]} : vector<1x128xf32> to vector<1x32xf32>
    %162 = vector.extract_strided_slice %159 {offsets = [0, 64], sizes = [1, 32], strides = [1, 1]} : vector<1x128xf32> to vector<1x32xf32>
    %163 = vector.extract_strided_slice %159 {offsets = [0, 96], sizes = [1, 32], strides = [1, 1]} : vector<1x128xf32> to vector<1x32xf32>
    %164 = arith.mulf %161, %151 : vector<1x32xf32>
    %165 = arith.mulf %160, %162 : vector<1x32xf32>
    %166 = arith.addf %164, %165 : vector<1x32xf32>
    %167 = math.tanh %166 : vector<1x32xf32>
    %168 = arith.mulf %163, %167 : vector<1x32xf32>
    %c0_85 = arith.constant 0 : index
    %c0_86 = arith.constant 0 : index
    %169 = vector.load %arg9[%c0_85, %c0_86] : memref<1x32xf32, #tpu.memory_space<vmem>>, vector<1x32xf32>
    tpu.vector_store %arg9[%c0_85, %c0_86], %166 {strides = array<i32>} : memref<1x32xf32, #tpu.memory_space<vmem>>, vector<1x32xf32>,
    %c0_87 = arith.constant 0 : index
    %c0_88 = arith.constant 0 : index
    %170 = vector.load %arg8[%c0_87, %c0_88] : memref<1x32xf32, #tpu.memory_space<vmem>>, vector<1x32xf32>
    tpu.vector_store %arg8[%c0_87, %c0_88], %168 {strides = array<i32>} : memref<1x32xf32, #tpu.memory_space<vmem>>, vector<1x32xf32>,
    %c7_i32 = arith.constant 7 : i32
    %c0_89 = arith.constant 0 : index
    %c0_90 = arith.constant 0 : index
    %171 = vector.load %arg8[%c0_89, %c0_90] : memref<1x32xf32, #tpu.memory_space<vmem>>, vector<1x32xf32>
    %c0_91 = arith.constant 0 : index
    %c0_92 = arith.constant 0 : index
    %172 = vector.load %arg9[%c0_91, %c0_92] : memref<1x32xf32, #tpu.memory_space<vmem>>, vector<1x32xf32>
    %173 = arith.index_cast %c7_i32 : i32 to index
    %c0_93 = arith.constant 0 : index
    %174 = vector.load %arg7[%173, %c0_93] : memref<8x128xf32, #tpu.memory_space<vmem>>, vector<1x128xf32>
    %cst_94 = arith.constant dense<0.000000e+00> : vector<1x128xf32>
    %175 = tpu.matmul %171, %7, %cst_94 {dimension_numbers = #tpu.dot_dimension_numbers<[1], [0], [0], [1], [0, 0, 1, 1], [], []>} : vector<1x32xf32>, vector<32x128xf32>, vector<1x128xf32> -> vector<1x128xf32>
    %176 = arith.addf %174, %175 : vector<1x128xf32>
    %177 = arith.mulf %176, %16 : vector<1x128xf32>
    %178 = math.tanh %177 : vector<1x128xf32>
    %179 = arith.mulf %178, %16 : vector<1x128xf32>
    %180 = arith.addf %179, %19 : vector<1x128xf32>
    %181 = vector.extract_strided_slice %180 {offsets = [0, 0], sizes = [1, 32], strides = [1, 1]} : vector<1x128xf32> to vector<1x32xf32>
    %182 = vector.extract_strided_slice %180 {offsets = [0, 32], sizes = [1, 32], strides = [1, 1]} : vector<1x128xf32> to vector<1x32xf32>
    %183 = vector.extract_strided_slice %180 {offsets = [0, 64], sizes = [1, 32], strides = [1, 1]} : vector<1x128xf32> to vector<1x32xf32>
    %184 = vector.extract_strided_slice %180 {offsets = [0, 96], sizes = [1, 32], strides = [1, 1]} : vector<1x128xf32> to vector<1x32xf32>
    %185 = arith.mulf %182, %172 : vector<1x32xf32>
    %186 = arith.mulf %181, %183 : vector<1x32xf32>
    %187 = arith.addf %185, %186 : vector<1x32xf32>
    %188 = math.tanh %187 : vector<1x32xf32>
    %189 = arith.mulf %184, %188 : vector<1x32xf32>
    %c0_95 = arith.constant 0 : index
    %c0_96 = arith.constant 0 : index
    %190 = vector.load %arg9[%c0_95, %c0_96] : memref<1x32xf32, #tpu.memory_space<vmem>>, vector<1x32xf32>
    tpu.vector_store %arg9[%c0_95, %c0_96], %187 {strides = array<i32>} : memref<1x32xf32, #tpu.memory_space<vmem>>, vector<1x32xf32>,
    %c0_97 = arith.constant 0 : index
    %c0_98 = arith.constant 0 : index
    %191 = vector.load %arg8[%c0_97, %c0_98] : memref<1x32xf32, #tpu.memory_space<vmem>>, vector<1x32xf32>
    tpu.vector_store %arg8[%c0_97, %c0_98], %189 {strides = array<i32>} : memref<1x32xf32, #tpu.memory_space<vmem>>, vector<1x32xf32>,
    %c8_i32 = arith.constant 8 : i32
    %c0_99 = arith.constant 0 : index
    %c0_100 = arith.constant 0 : index
    %192 = vector.load %arg8[%c0_99, %c0_100] : memref<1x32xf32, #tpu.memory_space<vmem>>, vector<1x32xf32>
    %c0_101 = arith.constant 0 : index
    %c0_102 = arith.constant 0 : index
    %193 = vector.load %arg4[%c0_101, %c0_102] : memref<1x32xf32, #tpu.memory_space<vmem>>, vector<1x32xf32>
    %194 = arith.mulf %192, %193 : vector<1x32xf32>
    %cst_103 = arith.constant dense<0.000000e+00> : vector<1xf32>
    %195 = vector.multi_reduction <add>, %194, %cst_103 [1] : vector<1x32xf32> to vector<1xf32>
    %196 = vector.shape_cast %195 : vector<1xf32> to vector<1x1xf32>
    %c0_104 = arith.constant 0 : index
    %c0_105 = arith.constant 0 : index
    %197 = vector.load %arg5[%c0_104, %c0_105] : memref<1x1xf32, #tpu.memory_space<vmem>>, vector<1x1xf32>
    %198 = arith.addf %196, %197 : vector<1x1xf32>
    %c0_106 = arith.constant 0 : index
    %c0_107 = arith.constant 0 : index
    %199 = vector.load %arg6[%c0_106, %c0_107] : memref<1x1xf32, #tpu.memory_space<vmem>>, vector<1x1xf32>
    tpu.vector_store %arg6[%c0_106, %c0_107], %198 {strides = array<i32>} : memref<1x1xf32, #tpu.memory_space<vmem>>, vector<1x1xf32>,
    return
  }
}

</mosaic_0001>

<llo_original>
// kernel: tpu_custom_call.1
$region0: #{tpu_custom_call.1}
  #allocation0 [shape = 'u32[]', space=smem, size = 0x4, offset = 0x4, fixed_abs, tag = 'smem constant byte address 0x4 - core index']
  #allocation1 [shape = 'u32[144,128]{1,0:T(1,128)}', space=vmem, size = 0x12000, scoped, tag = 'internal scratch']
  #allocation2 [shape = 'f32[8,128]{1,0:T(8,128)}', space=vmem, size = 0x1000, scoped, tag = 'scratch operand']
  #allocation3 [shape = 'f32[1,32]{1,0:T(1,128)}', space=vmem, size = 0x200, scoped, tag = 'scratch operand']
  #allocation4 [shape = 'f32[1,32]{1,0:T(1,128)}', space=vmem, size = 0x200, scoped, tag = 'scratch operand']
  #allocation5 [shape = 'f32[1,1]{1,0:T(1,128)S(1)}', space=vmem, size = 0x200, scoped, tag = 'scoped memory for tpu_custom_call.1']
  %s0 = inlined_call_operand.hbm [shape: f32[8,16], index: 0, kind: input, shape index: {}]
  %s1 = inlined_call_operand.hbm [shape: f32[16,128], index: 1, kind: input, shape index: {}]
  %s2 = inlined_call_operand.hbm [shape: f32[32,128], index: 2, kind: input, shape index: {}]
  %s3 = inlined_call_operand.vmem [shape: f32[1,128], index: 3, kind: input, shape index: {}]
  %s4 = inlined_call_operand.vmem [shape: f32[1,32], index: 4, kind: input, shape index: {}]
  %s5 = inlined_call_operand.<no memory space> [shape: f32[1,1], index: 5, kind: input, shape index: {}]
  %s6 = inlined_call_operand.hbm [shape: f32[1,1], index: 6, kind: output, shape index: {}]
  %s7 = sld [smem:[#allocation0]]
  $region46: #{tpu_custom_call.1} parent=0
    _
  %s9 = ssub.s32 1, %s7
  %s10 = scalar_select 0, %s9, %s7
  %v11 = vstv %s5
  %12 = vst [vmem:[#allocation5] sm:$0x1] %v11
  $region1: #{tpu_custom_call.1} parent=0
    #allocation6 [shape = 'u8[4096]{0}', space=vmem, size = 0x1000, scoped, tag = 'input window, operand 0, single buffered']
    #allocation7 [shape = 's32[1]{0}', space=sflag, size = 0x4, scoped, tag = 'scoped memory for tpu_custom_call.1']
    #allocation8 [shape = 's32[1]{0}', space=sflag, size = 0x4, scoped, tag = 'scoped memory for tpu_custom_call.1']
    #allocation9 [shape = 'u8[8192]{0}', space=vmem, size = 0x2000, scoped, tag = 'input window, operand 1, single buffered']
    #allocation10 [shape = 's32[1]{0}', space=sflag, size = 0x4, scoped, tag = 'scoped memory for tpu_custom_call.1']
    #allocation11 [shape = 'u8[16384]{0}', space=vmem, size = 0x4000, scoped, tag = 'input window, operand 2, single buffered']
    #allocation12 [shape = 'u8[512]{0}', space=vmem, size = 0x400, scoped, tag = 'output window, operand 0, single buffered']
    %13 = vsyncpa [#allocation7], 0
    %14 = vsyncpa [#allocation10], 0
    %15 = vsyncpa [#allocation8], 0
    // Predicated region
    $region2: #{tpu_custom_call.1} parent=1 // pred_check
      _
    $region3: #{tpu_custom_call.1} parent=1 // pred_check_branch
      %17 = sbr.rel (0) target = $region5
    $region4: #{tpu_custom_call.1} parent=1 // pred_region
      %s19 = ssub.s32 128, 128
      %20 = vsyncadd [#allocation7], %s19
      %s22 = sshll.u32 [#allocation6], 4
      %s23 = int_to_ptr.vmem [resolvable:$true] %s22
      %25 = dma.hbm_to_vmem [thread:$0]  %s0, 128, %s23, [#allocation7]
    $region5: #{tpu_custom_call.1} parent=1 // pred_fallthru
      _
    // Predicated region
    $region6: #{tpu_custom_call.1} parent=1 // pred_check
      _
    $region7: #{tpu_custom_call.1} parent=1 // pred_check_branch
      %27 = sbr.rel (0) target = $region9
    $region8: #{tpu_custom_call.1} parent=1 // pred_region
      %s29 = ssub.s32 256, 256
      %30 = vsyncadd [#allocation10], %s29
      %s31 = sshll.u32 [#allocation9], 4
      %s32 = int_to_ptr.vmem [resolvable:$true] %s31
      %37 = dma.hbm_to_vmem [thread:$0]  %s1, 256, %s32, [#allocation10], 128, 128, 8
    $region9: #{tpu_custom_call.1} parent=1 // pred_fallthru
      _
    // Predicated region
    $region10: #{tpu_custom_call.1} parent=1 // pred_check
      _
    $region11: #{tpu_custom_call.1} parent=1 // pred_check_branch
      %39 = sbr.rel (0) target = $region13
    $region12: #{tpu_custom_call.1} parent=1 // pred_region
      %s41 = ssub.s32 512, 512
      %42 = vsyncadd [#allocation10], %s41
      %s43 = sshll.u32 [#allocation11], 4
      %s44 = int_to_ptr.vmem [resolvable:$true] %s43
      %49 = dma.hbm_to_vmem [thread:$0]  %s2, 512, %s44, [#allocation10], 128, 128, 8
    $region13: #{tpu_custom_call.1} parent=1 // pred_fallthru
      _
    // Predicated region
    $region14: #{tpu_custom_call.1} parent=1 // pred_check
      _
    $region15: #{tpu_custom_call.1} parent=1 // pred_check_branch
      %51 = sbr.rel (0) target = $region17
    $region16: #{tpu_custom_call.1} parent=1 // pred_region
      _
    $region17: #{tpu_custom_call.1} parent=1 // pred_fallthru
      _
    // Predicated region
    $region18: #{tpu_custom_call.1} parent=1 // pred_check
      _
    $region19: #{tpu_custom_call.1} parent=1 // pred_check_branch
      %53 = sbr.rel (0) target = $region21
    $region20: #{tpu_custom_call.1} parent=1 // pred_region
      _
    $region21: #{tpu_custom_call.1} parent=1 // pred_fallthru
      _
    // Predicated region
    $region22: #{tpu_custom_call.1} parent=1 // pred_check
      _
    $region23: #{tpu_custom_call.1} parent=1 // pred_check_branch
      %55 = sbr.rel (0) target = $region25
    $region24: #{tpu_custom_call.1} parent=1 // pred_region
      _
    $region25: #{tpu_custom_call.1} parent=1 // pred_fallthru
      _
    // Predicated region
    $region26: #{tpu_custom_call.1} parent=1 // pred_check
      _
    $region27: #{tpu_custom_call.1} parent=1 // pred_check_branch
      %57 = sbr.rel (0) target = $region29
    $region28: #{tpu_custom_call.1} parent=1 // pred_region
      %58 = dma.done [#allocation7], 128
    $region29: #{tpu_custom_call.1} parent=1 // pred_fallthru
      _
    // Predicated region
    $region30: #{tpu_custom_call.1} parent=1 // pred_check
      _
    $region31: #{tpu_custom_call.1} parent=1 // pred_check_branch
      %60 = sbr.rel (0) target = $region33
    $region32: #{tpu_custom_call.1} parent=1 // pred_region
      %61 = dma.done [#allocation10], 256
    $region33: #{tpu_custom_call.1} parent=1 // pred_fallthru
      _
    // Predicated region
    $region34: #{tpu_custom_call.1} parent=1 // pred_check
      _
    $region35: #{tpu_custom_call.1} parent=1 // pred_check_branch
      %63 = sbr.rel (0) target = $region37
    $region36: #{tpu_custom_call.1} parent=1 // pred_region
      %64 = dma.done [#allocation10], 512
    $region37: #{tpu_custom_call.1} parent=1 // pred_fallthru
      _
    %v65 = vld [vmem:[#allocation6] sm:$0xff]
    %v66 = vld [vmem:[#allocation9] sm:$0xff]
    %v67 = vld [vmem:[#allocation9 + $0x8] sm:$0xff]
    %v68 = vld [vmem:[%s3] sm:$0x1]
    %v70 = vlaneseq
    %v71 = vshrl.u32 %v70, 7
    %v72 = vsub.s32 0, %v71
    %v73 = vrot.slane %v68, %v72
    %vm75 = vcmask 130048
    %v77 = vsel %vm75, %v65, 0
    %79 = vmatprep.subr.mxu0 0.0
    %80 = vmatpush1.msra.mxu0 %v66
    %81 = vmatprep.subr.mxu0 0.0
    %82 = vmatpush1.msra.mxu0 %v67
    %83 = vmatprep.subr.mxu0 0.0
    %84 = vmatpush1.msra.mxu0 0.0
    %85 = vmatprep.subr.mxu0 0.0
    %86 = vmatpush1.msra.mxu0 0.0
    %87 = vmatprep.subr.mxu0 0.0
    %88 = vmatpush1.msra.mxu0 0.0
    %89 = vmatprep.subr.mxu0 0.0
    %90 = vmatpush1.msra.mxu0 0.0
    %91 = vmatprep.subr.mxu0 0.0
    %92 = vmatpush1.msra.mxu0 0.0
    %93 = vmatprep.subr.mxu0 0.0
    %94 = vmatpush1.msra.mxu0 0.0
    %95 = vmatprep.subr.mxu0 0.0
    %96 = vmatpush1.msra.mxu0 0.0
    %97 = vmatprep.subr.mxu0 0.0
    %98 = vmatpush1.msra.mxu0 0.0
    %99 = vmatprep.subr.mxu0 0.0
    %100 = vmatpush1.msra.mxu0 0.0
    %101 = vmatprep.subr.mxu0 0.0
    %102 = vmatpush1.msra.mxu0 0.0
    %103 = vmatprep.subr.mxu0 0.0
    %104 = vmatpush1.msra.mxu0 0.0
    %105 = vmatprep.subr.mxu0 0.0
    %106 = vmatpush1.msra.mxu0 0.0
    %107 = vmatprep.subr.mxu0 0.0
    %108 = vmatpush1.msra.mxu0 0.0
    %109 = vmatprep.subr.mxu0 0.0
    %110 = vmatpush1.msra.mxu0 0.0
    %111 = vmatprep.subr.mxu0 0.0
    %112 = vmatpush1.msra.mxu0 0.0
    %113 = vmatprep.subr.mxu0 0.0
    %114 = vmatpush1.msra.mxu0 0.0
    %115 = vmatprep.subr.mxu0 0.0
    %116 = vmatpush1.msra.mxu0 0.0
    %117 = vmatprep.subr.mxu0 0.0
    %118 = vmatpush1.msra.mxu0 0.0
    %119 = vmatprep.subr.mxu0 0.0
    %120 = vmatpush1.msra.mxu0 0.0
    %121 = vmatprep.subr.mxu0 0.0
    %122 = vmatpush1.msra.mxu0 0.0
    %123 = vmatprep.subr.mxu0 0.0
    %124 = vmatpush1.msra.mxu0 0.0
    %125 = vmatprep.subr.mxu0 0.0
    %126 = vmatpush1.msra.mxu0 0.0
    %127 = vmatprep.subr.mxu0 0.0
    %128 = vmatpush1.msra.mxu0 0.0
    %129 = vmatprep.subr.mxu0 0.0
    %130 = vmatpush1.msra.mxu0 0.0
    %131 = vmatprep.subr.mxu0 0.0
    %132 = vmatpush1.msra.mxu0 0.0
    %133 = vmatprep.subr.mxu0 0.0
    %134 = vmatpush1.msra.mxu0 0.0
    %135 = vmatprep.subr.mxu0 0.0
    %136 = vmatpush1.msra.mxu0 0.0
    %137 = vmatprep.subr.mxu0 0.0
    %138 = vmatpush1.msra.mxu0 0.0
    %139 = vmatprep.subr.mxu0 0.0
    %140 = vmatpush1.msra.mxu0 0.0
    %141 = vmatprep.subr.mxu0 0.0
    %142 = vmatpush1.msra.mxu0 0.0
    %143 = vmatprep.mubr.f32.mxu0 0.0
    %144 = vmatmul.mubr.f32.gmra.mrb[0].mxu0 %v77
    %v145 = vpop.f32.mrb[0].mxu0
    %v146 = vadd.f32 %v73, %v145
    %v147 = vpop.f32.mrb[0].mxu0
    %148 = vdwg.mxu0
    %149 = vst [vmem:[#allocation2] sm:$0xff] %v146
    %v150 = vld [vmem:[#allocation11] sm:$0xff]
    %v151 = vld [vmem:[#allocation11 + $0x8] sm:$0xff]
    %v152 = vld [vmem:[#allocation11 + $0x10] sm:$0xff]
    %v153 = vld [vmem:[#allocation11 + $0x18] sm:$0xff]
    %v154 = vlaneseq
    %v155 = vand.u32 %v154, 127
    %vm156 = vcmp.ge.s32.totalorder %v155, 64
    %vm157 = vcmp.lt.s32.totalorder %v155, 96
    %vm158 = vmand %vm156, %vm157
    %v159 = vsel %vm158, 1.0, 0.5
    %v160 = vsel %vm158, 0.0, 0.5
    %vm161 = vcmask 253952
    %162 = vst.msk [vmem:[#allocation3] sm:$0x1] %vm161, 0.0
    %163 = vst.msk [vmem:[#allocation4] sm:$0x1] %vm161, 0.0
    %v164 = vld [vmem:[#allocation3] sm:$0x1]
    %v165 = vld [vmem:[#allocation4] sm:$0x1]
    %v166 = vld [vmem:[#allocation2] sm:$0x1]
    %vm167 = vcmask 261120
    %v169 = vsel %vm167, %v164, 0
    %171 = vmatprep.subr.mxu0 0.0
    %172 = vmatpush1.msra.mxu0 %v150
    %173 = vmatprep.subr.mxu0 0.0
    %174 = vmatpush1.msra.mxu0 %v151
    %175 = vmatprep.subr.mxu0 0.0
    %176 = vmatpush1.msra.mxu0 %v152
    %177 = vmatprep.subr.mxu0 0.0
    %178 = vmatpush1.msra.mxu0 %v153
    %179 = vmatprep.subr.mxu0 0.0
    %180 = vmatpush1.msra.mxu0 0.0
    %181 = vmatprep.subr.mxu0 0.0
    %182 = vmatpush1.msra.mxu0 0.0
    %183 = vmatprep.subr.mxu0 0.0
    %184 = vmatpush1.msra.mxu0 0.0
    %185 = vmatprep.subr.mxu0 0.0
    %186 = vmatpush1.msra.mxu0 0.0
    %187 = vmatprep.subr.mxu0 0.0
    %188 = vmatpush1.msra.mxu0 0.0
    %189 = vmatprep.subr.mxu0 0.0
    %190 = vmatpush1.msra.mxu0 0.0
    %191 = vmatprep.subr.mxu0 0.0
    %192 = vmatpush1.msra.mxu0 0.0
    %193 = vmatprep.subr.mxu0 0.0
    %194 = vmatpush1.msra.mxu0 0.0
    %195 = vmatprep.subr.mxu0 0.0
    %196 = vmatpush1.msra.mxu0 0.0
    %197 = vmatprep.subr.mxu0 0.0
    %198 = vmatpush1.msra.mxu0 0.0
    %199 = vmatprep.subr.mxu0 0.0
    %200 = vmatpush1.msra.mxu0 0.0
    %201 = vmatprep.subr.mxu0 0.0
    %202 = vmatpush1.msra.mxu0 0.0
    %203 = vmatprep.subr.mxu0 0.0
    %204 = vmatpush1.msra.mxu0 0.0
    %205 = vmatprep.subr.mxu0 0.0
    %206 = vmatpush1.msra.mxu0 0.0
    %207 = vmatprep.subr.mxu0 0.0
    %208 = vmatpush1.msra.mxu0 0.0
    %209 = vmatprep.subr.mxu0 0.0
    %210 = vmatpush1.msra.mxu0 0.0
    %211 = vmatprep.subr.mxu0 0.0
    %212 = vmatpush1.msra.mxu0 0.0
    %213 = vmatprep.subr.mxu0 0.0
    %214 = vmatpush1.msra.mxu0 0.0
    %215 = vmatprep.subr.mxu0 0.0
    %216 = vmatpush1.msra.mxu0 0.0
    %217 = vmatprep.subr.mxu0 0.0
    %218 = vmatpush1.msra.mxu0 0.0
    %219 = vmatprep.subr.mxu0 0.0
    %220 = vmatpush1.msra.mxu0 0.0
    %221 = vmatprep.subr.mxu0 0.0
    %222 = vmatpush1.msra.mxu0 0.0
    %223 = vmatprep.subr.mxu0 0.0
    %224 = vmatpush1.msra.mxu0 0.0
    %225 = vmatprep.subr.mxu0 0.0
    %226 = vmatpush1.msra.mxu0 0.0
    %227 = vmatprep.subr.mxu0 0.0
    %228 = vmatpush1.msra.mxu0 0.0
    %229 = vmatprep.subr.mxu0 0.0
    %230 = vmatpush1.msra.mxu0 0.0
    %231 = vmatprep.subr.mxu0 0.0
    %232 = vmatpush1.msra.mxu0 0.0
    %233 = vmatprep.subr.mxu0 0.0
    %234 = vmatpush1.msra.mxu0 0.0
    %235 = vmatprep.mubr.f32.mxu0 0.0
    %236 = vmatmul.mubr.f32.gmra.mrb[0].mxu0 %v169
    %v237 = vpop.f32.mrb[0].mxu0
    %v238 = vadd.f32 0.0, %v237
    %v239 = vpop.f32.mrb[0].mxu0
    %240 = vdwg.mxu0
    %v241 = vadd.f32 %v166, %v238
    %v242 = vmul.f32 %v241, %v159
    %v243 = vtanh.pop %v242
    %v244 = vmul.f32 %v243, %v159
    %v245 = vadd.f32 %v244, %v160
    %v247 = vlaneseq
    %v248 = vshrl.u32 %v247, 7
    %v249 = vsub.s32 0, %v248
    %v250 = vrot.slane %v165, %v249
    %251 = vrot.lane.b32.xlu0 %v250, 32
    %v252 = vpop.permute.xlu0 %251
    %v254 = vmul.f32 %v245, %v252
    %256 = vrot.lane.b32.xlu0 %v245, 64
    %v257 = vpop.permute.xlu0 %256
    %v259 = vmul.f32 %v245, %v257
    %261 = vrot.lane.b32.xlu0 %v259, 32
    %v262 = vpop.permute.xlu0 %261
    %v264 = vadd.f32 %v254, %v262
    %v265 = vtanh.pop %v264
    %267 = vrot.lane.b32.xlu0 %v265, 64
    %v268 = vpop.permute.xlu0 %267
    %v270 = vmul.f32 %v245, %v268
    %272 = vrot.lane.b32.xlu0 %v264, 96
    %v273 = vpop.permute.xlu0 %272
    %275 = vst.msk [vmem:[#allocation4] sm:$0x1] %vm161, %v273
    %277 = vrot.lane.b32.xlu0 %v270, 32
    %v278 = vpop.permute.xlu0 %277
    %280 = vst.msk [vmem:[#allocation3] sm:$0x1] %vm161, %v278
    %v281 = vld [vmem:[#allocation3] sm:$0x1]
    %v282 = vld [vmem:[#allocation4] sm:$0x1]
    %v283 = vld [vmem:[#allocation2 + $0x1] sm:$0x1]
    %v285 = vsel %vm167, %v281, 0
    %287 = vmatprep.subr.mxu0 0.0
    %288 = vmatpush1.msra.mxu0 %v150
    %289 = vmatprep.subr.mxu0 0.0
    %290 = vmatpush1.msra.mxu0 %v151
    %291 = vmatprep.subr.mxu0 0.0
    %292 = vmatpush1.msra.mxu0 %v152
    %293 = vmatprep.subr.mxu0 0.0
    %294 = vmatpush1.msra.mxu0 %v153
    %295 = vmatprep.subr.mxu0 0.0
    %296 = vmatpush1.msra.mxu0 0.0
    %297 = vmatprep.subr.mxu0 0.0
    %298 = vmatpush1.msra.mxu0 0.0
    %299 = vmatprep.subr.mxu0 0.0
    %300 = vmatpush1.msra.mxu0 0.0
    %301 = vmatprep.subr.mxu0 0.0
    %302 = vmatpush1.msra.mxu0 0.0
    %303 = vmatprep.subr.mxu0 0.0
    %304 = vmatpush1.msra.mxu0 0.0
    %305 = vmatprep.subr.mxu0 0.0
    %306 = vmatpush1.msra.mxu0 0.0
    %307 = vmatprep.subr.mxu0 0.0
    %308 = vmatpush1.msra.mxu0 0.0
    %309 = vmatprep.subr.mxu0 0.0
    %310 = vmatpush1.msra.mxu0 0.0
    %311 = vmatprep.subr.mxu0 0.0
    %312 = vmatpush1.msra.mxu0 0.0
    %313 = vmatprep.subr.mxu0 0.0
    %314 = vmatpush1.msra.mxu0 0.0
    %315 = vmatprep.subr.mxu0 0.0
    %316 = vmatpush1.msra.mxu0 0.0
    %317 = vmatprep.subr.mxu0 0.0
    %318 = vmatpush1.msra.mxu0 0.0
    %319 = vmatprep.subr.mxu0 0.0
    %320 = vmatpush1.msra.mxu0 0.0
    %321 = vmatprep.subr.mxu0 0.0
    %322 = vmatpush1.msra.mxu0 0.0
    %323 = vmatprep.subr.mxu0 0.0
    %324 = vmatpush1.msra.mxu0 0.0
    %325 = vmatprep.subr.mxu0 0.0
    %326 = vmatpush1.msra.mxu0 0.0
    %327 = vmatprep.subr.mxu0 0.0
    %328 = vmatpush1.msra.mxu0 0.0
    %329 = vmatprep.subr.mxu0 0.0
    %330 = vmatpush1.msra.mxu0 0.0
    %331 = vmatprep.subr.mxu0 0.0
    %332 = vmatpush1.msra.mxu0 0.0
    %333 = vmatprep.subr.mxu0 0.0
    %334 = vmatpush1.msra.mxu0 0.0
    %335 = vmatprep.subr.mxu0 0.0
    %336 = vmatpush1.msra.mxu0 0.0
    %337 = vmatprep.subr.mxu0 0.0
    %338 = vmatpush1.msra.mxu0 0.0
    %339 = vmatprep.subr.mxu0 0.0
    %340 = vmatpush1.msra.mxu0 0.0
    %341 = vmatprep.subr.mxu0 0.0
    %342 = vmatpush1.msra.mxu0 0.0
    %343 = vmatprep.subr.mxu0 0.0
    %344 = vmatpush1.msra.mxu0 0.0
    %345 = vmatprep.subr.mxu0 0.0
    %346 = vmatpush1.msra.mxu0 0.0
    %347 = vmatprep.subr.mxu0 0.0
    %348 = vmatpush1.msra.mxu0 0.0
    %349 = vmatprep.subr.mxu0 0.0
    %350 = vmatpush1.msra.mxu0 0.0
    %351 = vmatprep.mubr.f32.mxu0 0.0
    %352 = vmatmul.mubr.f32.gmra.mrb[0].mxu0 %v285
    %v353 = vpop.f32.mrb[0].mxu0
    %v354 = vadd.f32 0.0, %v353
    %v355 = vpop.f32.mrb[0].mxu0
    %356 = vdwg.mxu0
    %v357 = vadd.f32 %v283, %v354
    %v358 = vmul.f32 %v357, %v159
    %v359 = vtanh.pop %v358
    %v360 = vmul.f32 %v359, %v159
    %v361 = vadd.f32 %v360, %v160
    %v363 = vlaneseq
    %v364 = vshrl.u32 %v363, 7
    %v365 = vsub.s32 0, %v364
    %v366 = vrot.slane %v282, %v365
    %367 = vrot.lane.b32.xlu0 %v366, 32
    %v368 = vpop.permute.xlu0 %367
    %v370 = vmul.f32 %v361, %v368
    %372 = vrot.lane.b32.xlu0 %v361, 64
    %v373 = vpop.permute.xlu0 %372
    %v375 = vmul.f32 %v361, %v373
    %377 = vrot.lane.b32.xlu0 %v375, 32
    %v378 = vpop.permute.xlu0 %377
    %v380 = vadd.f32 %v370, %v378
    %v381 = vtanh.pop %v380
    %383 = vrot.lane.b32.xlu0 %v381, 64
    %v384 = vpop.permute.xlu0 %383
    %v386 = vmul.f32 %v361, %v384
    %388 = vrot.lane.b32.xlu0 %v380, 96
    %v389 = vpop.permute.xlu0 %388
    %391 = vst.msk [vmem:[#allocation4] sm:$0x1] %vm161, %v389
    %393 = vrot.lane.b32.xlu0 %v386, 32
    %v394 = vpop.permute.xlu0 %393
    %396 = vst.msk [vmem:[#allocation3] sm:$0x1] %vm161, %v394
    %v397 = vld [vmem:[#allocation3] sm:$0x1]
    %v398 = vld [vmem:[#allocation4] sm:$0x1]
    %v399 = vld [vmem:[#allocation2 + $0x2] sm:$0x1]
    %v401 = vsel %vm167, %v397, 0
    %403 = vmatprep.subr.mxu0 0.0
    %404 = vmatpush1.msra.mxu0 %v150
    %405 = vmatprep.subr.mxu0 0.0
    %406 = vmatpush1.msra.mxu0 %v151
    %407 = vmatprep.subr.mxu0 0.0
    %408 = vmatpush1.msra.mxu0 %v152
    %409 = vmatprep.subr.mxu0 0.0
    %410 = vmatpush1.msra.mxu0 %v153
    %411 = vmatprep.subr.mxu0 0.0
    %412 = vmatpush1.msra.mxu0 0.0
    %413 = vmatprep.subr.mxu0 0.0
    %414 = vmatpush1.msra.mxu0 0.0
    %415 = vmatprep.subr.mxu0 0.0
    %416 = vmatpush1.msra.mxu0 0.0
    %417 = vmatprep.subr.mxu0 0.0
    %418 = vmatpush1.msra.mxu0 0.0
    %419 = vmatprep.subr.mxu0 0.0
    %420 = vmatpush1.msra.mxu0 0.0
    %421 = vmatprep.subr.mxu0 0.0
    %422 = vmatpush1.msra.mxu0 0.0
    %423 = vmatprep.subr.mxu0 0.0
    %424 = vmatpush1.msra.mxu0 0.0
    %425 = vmatprep.subr.mxu0 0.0
    %426 = vmatpush1.msra.mxu0 0.0
    %427 = vmatprep.subr.mxu0 0.0
    %428 = vmatpush1.msra.mxu0 0.0
    %429 = vmatprep.subr.mxu0 0.0
    %430 = vmatpush1.msra.mxu0 0.0
    %431 = vmatprep.subr.mxu0 0.0
    %432 = vmatpush1.msra.mxu0 0.0
    %433 = vmatprep.subr.mxu0 0.0
    %434 = vmatpush1.msra.mxu0 0.0
    %435 = vmatprep.subr.mxu0 0.0
    %436 = vmatpush1.msra.mxu0 0.0
    %437 = vmatprep.subr.mxu0 0.0
    %438 = vmatpush1.msra.mxu0 0.0
    %439 = vmatprep.subr.mxu0 0.0
    %440 = vmatpush1.msra.mxu0 0.0
    %441 = vmatprep.subr.mxu0 0.0
    %442 = vmatpush1.msra.mxu0 0.0
    %443 = vmatprep.subr.mxu0 0.0
    %444 = vmatpush1.msra.mxu0 0.0
    %445 = vmatprep.subr.mxu0 0.0
    %446 = vmatpush1.msra.mxu0 0.0
    %447 = vmatprep.subr.mxu0 0.0
    %448 = vmatpush1.msra.mxu0 0.0
    %449 = vmatprep.subr.mxu0 0.0
    %450 = vmatpush1.msra.mxu0 0.0
    %451 = vmatprep.subr.mxu0 0.0
    %452 = vmatpush1.msra.mxu0 0.0
    %453 = vmatprep.subr.mxu0 0.0
    %454 = vmatpush1.msra.mxu0 0.0
    %455 = vmatprep.subr.mxu0 0.0
    %456 = vmatpush1.msra.mxu0 0.0
    %457 = vmatprep.subr.mxu0 0.0
    %458 = vmatpush1.msra.mxu0 0.0
    %459 = vmatprep.subr.mxu0 0.0
    %460 = vmatpush1.msra.mxu0 0.0
    %461 = vmatprep.subr.mxu0 0.0
    %462 = vmatpush1.msra.mxu0 0.0
    %463 = vmatprep.subr.mxu0 0.0
    %464 = vmatpush1.msra.mxu0 0.0
    %465 = vmatprep.subr.mxu0 0.0
    %466 = vmatpush1.msra.mxu0 0.0
    %467 = vmatprep.mubr.f32.mxu0 0.0
    %468 = vmatmul.mubr.f32.gmra.mrb[0].mxu0 %v401
    %v469 = vpop.f32.mrb[0].mxu0
    %v470 = vadd.f32 0.0, %v469
    %v471 = vpop.f32.mrb[0].mxu0
    %472 = vdwg.mxu0
    %v473 = vadd.f32 %v399, %v470
    %v474 = vmul.f32 %v473, %v159
    %v475 = vtanh.pop %v474
    %v476 = vmul.f32 %v475, %v159
    %v477 = vadd.f32 %v476, %v160
    %v479 = vlaneseq
    %v480 = vshrl.u32 %v479, 7
    %v481 = vsub.s32 0, %v480
    %v482 = vrot.slane %v398, %v481
    %483 = vrot.lane.b32.xlu0 %v482, 32
    %v484 = vpop.permute.xlu0 %483
    %v486 = vmul.f32 %v477, %v484
    %488 = vrot.lane.b32.xlu0 %v477, 64
    %v489 = vpop.permute.xlu0 %488
    %v491 = vmul.f32 %v477, %v489
    %493 = vrot.lane.b32.xlu0 %v491, 32
    %v494 = vpop.permute.xlu0 %493
    %v496 = vadd.f32 %v486, %v494
    %v497 = vtanh.pop %v496
    %499 = vrot.lane.b32.xlu0 %v497, 64
    %v500 = vpop.permute.xlu0 %499
    %v502 = vmul.f32 %v477, %v500
    %504 = vrot.lane.b32.xlu0 %v496, 96
    %v505 = vpop.permute.xlu0 %504
    %507 = vst.msk [vmem:[#allocation4] sm:$0x1] %vm161, %v505
    %509 = vrot.lane.b32.xlu0 %v502, 32
    %v510 = vpop.permute.xlu0 %509
    %512 = vst.msk [vmem:[#allocation3] sm:$0x1] %vm161, %v510
    %v513 = vld [vmem:[#allocation3] sm:$0x1]
    %v514 = vld [vmem:[#allocation4] sm:$0x1]
    %v515 = vld [vmem:[#allocation2 + $0x3] sm:$0x1]
    %v517 = vsel %vm167, %v513, 0
    %519 = vmatprep.subr.mxu0 0.0
    %520 = vmatpush1.msra.mxu0 %v150
    %521 = vmatprep.subr.mxu0 0.0
    %522 = vmatpush1.msra.mxu0 %v151
    %523 = vmatprep.subr.mxu0 0.0
    %524 = vmatpush1.msra.mxu0 %v152
    %525 = vmatprep.subr.mxu0 0.0
    %526 = vmatpush1.msra.mxu0 %v153
    %527 = vmatprep.subr.mxu0 0.0
    %528 = vmatpush1.msra.mxu0 0.0
    %529 = vmatprep.subr.mxu0 0.0
    %530 = vmatpush1.msra.mxu0 0.0
    %531 = vmatprep.subr.mxu0 0.0
    %532 = vmatpush1.msra.mxu0 0.0
    %533 = vmatprep.subr.mxu0 0.0
    %534 = vmatpush1.msra.mxu0 0.0
    %535 = vmatprep.subr.mxu0 0.0
    %536 = vmatpush1.msra.mxu0 0.0
    %537 = vmatprep.subr.mxu0 0.0
    %538 = vmatpush1.msra.mxu0 0.0
    %539 = vmatprep.subr.mxu0 0.0
    %540 = vmatpush1.msra.mxu0 0.0
    %541 = vmatprep.subr.mxu0 0.0
    %542 = vmatpush1.msra.mxu0 0.0
    %543 = vmatprep.subr.mxu0 0.0
    %544 = vmatpush1.msra.mxu0 0.0
    %545 = vmatprep.subr.mxu0 0.0
    %546 = vmatpush1.msra.mxu0 0.0
    %547 = vmatprep.subr.mxu0 0.0
    %548 = vmatpush1.msra.mxu0 0.0
    %549 = vmatprep.subr.mxu0 0.0
    %550 = vmatpush1.msra.mxu0 0.0
    %551 = vmatprep.subr.mxu0 0.0
    %552 = vmatpush1.msra.mxu0 0.0
    %553 = vmatprep.subr.mxu0 0.0
    %554 = vmatpush1.msra.mxu0 0.0
    %555 = vmatprep.subr.mxu0 0.0
    %556 = vmatpush1.msra.mxu0 0.0
    %557 = vmatprep.subr.mxu0 0.0
    %558 = vmatpush1.msra.mxu0 0.0
    %559 = vmatprep.subr.mxu0 0.0
    %560 = vmatpush1.msra.mxu0 0.0
    %561 = vmatprep.subr.mxu0 0.0
    %562 = vmatpush1.msra.mxu0 0.0
    %563 = vmatprep.subr.mxu0 0.0
    %564 = vmatpush1.msra.mxu0 0.0
    %565 = vmatprep.subr.mxu0 0.0
    %566 = vmatpush1.msra.mxu0 0.0
    %567 = vmatprep.subr.mxu0 0.0
    %568 = vmatpush1.msra.mxu0 0.0
    %569 = vmatprep.subr.mxu0 0.0
    %570 = vmatpush1.msra.mxu0 0.0
    %571 = vmatprep.subr.mxu0 0.0
    %572 = vmatpush1.msra.mxu0 0.0
    %573 = vmatprep.subr.mxu0 0.0
    %574 = vmatpush1.msra.mxu0 0.0
    %575 = vmatprep.subr.mxu0 0.0
    %576 = vmatpush1.msra.mxu0 0.0
    %577 = vmatprep.subr.mxu0 0.0
    %578 = vmatpush1.msra.mxu0 0.0
    %579 = vmatprep.subr.mxu0 0.0
    %580 = vmatpush1.msra.mxu0 0.0
    %581 = vmatprep.subr.mxu0 0.0
    %582 = vmatpush1.msra.mxu0 0.0
    %583 = vmatprep.mubr.f32.mxu0 0.0
    %584 = vmatmul.mubr.f32.gmra.mrb[0].mxu0 %v517
    %v585 = vpop.f32.mrb[0].mxu0
    %v586 = vadd.f32 0.0, %v585
    %v587 = vpop.f32.mrb[0].mxu0
    %588 = vdwg.mxu0
    %v589 = vadd.f32 %v515, %v586
    %v590 = vmul.f32 %v589, %v159
    %v591 = vtanh.pop %v590
    %v592 = vmul.f32 %v591, %v159
    %v593 = vadd.f32 %v592, %v160
    %v595 = vlaneseq
    %v596 = vshrl.u32 %v595, 7
    %v597 = vsub.s32 0, %v596
    %v598 = vrot.slane %v514, %v597
    %599 = vrot.lane.b32.xlu0 %v598, 32
    %v600 = vpop.permute.xlu0 %599
    %v602 = vmul.f32 %v593, %v600
    %604 = vrot.lane.b32.xlu0 %v593, 64
    %v605 = vpop.permute.xlu0 %604
    %v607 = vmul.f32 %v593, %v605
    %609 = vrot.lane.b32.xlu0 %v607, 32
    %v610 = vpop.permute.xlu0 %609
    %v612 = vadd.f32 %v602, %v610
    %v613 = vtanh.pop %v612
    %615 = vrot.lane.b32.xlu0 %v613, 64
    %v616 = vpop.permute.xlu0 %615
    %v618 = vmul.f32 %v593, %v616
    %620 = vrot.lane.b32.xlu0 %v612, 96
    %v621 = vpop.permute.xlu0 %620
    %623 = vst.msk [vmem:[#allocation4] sm:$0x1] %vm161, %v621
    %625 = vrot.lane.b32.xlu0 %v618, 32
    %v626 = vpop.permute.xlu0 %625
    %628 = vst.msk [vmem:[#allocation3] sm:$0x1] %vm161, %v626
    %v629 = vld [vmem:[#allocation3] sm:$0x1]
    %v630 = vld [vmem:[#allocation4] sm:$0x1]
    %v631 = vld [vmem:[#allocation2 + $0x4] sm:$0x1]
    %v633 = vsel %vm167, %v629, 0
    %635 = vmatprep.subr.mxu0 0.0
    %636 = vmatpush1.msra.mxu0 %v150
    %637 = vmatprep.subr.mxu0 0.0
    %638 = vmatpush1.msra.mxu0 %v151
    %639 = vmatprep.subr.mxu0 0.0
    %640 = vmatpush1.msra.mxu0 %v152
    %641 = vmatprep.subr.mxu0 0.0
    %642 = vmatpush1.msra.mxu0 %v153
    %643 = vmatprep.subr.mxu0 0.0
    %644 = vmatpush1.msra.mxu0 0.0
    %645 = vmatprep.subr.mxu0 0.0
    %646 = vmatpush1.msra.mxu0 0.0
    %647 = vmatprep.subr.mxu0 0.0
    %648 = vmatpush1.msra.mxu0 0.0
    %649 = vmatprep.subr.mxu0 0.0
    %650 = vmatpush1.msra.mxu0 0.0
    %651 = vmatprep.subr.mxu0 0.0
    %652 = vmatpush1.msra.mxu0 0.0
    %653 = vmatprep.subr.mxu0 0.0
    %654 = vmatpush1.msra.mxu0 0.0
    %655 = vmatprep.subr.mxu0 0.0
    %656 = vmatpush1.msra.mxu0 0.0
    %657 = vmatprep.subr.mxu0 0.0
    %658 = vmatpush1.msra.mxu0 0.0
    %659 = vmatprep.subr.mxu0 0.0
    %660 = vmatpush1.msra.mxu0 0.0
    %661 = vmatprep.subr.mxu0 0.0
    %662 = vmatpush1.msra.mxu0 0.0
    %663 = vmatprep.subr.mxu0 0.0
    %664 = vmatpush1.msra.mxu0 0.0
    %665 = vmatprep.subr.mxu0 0.0
    %666 = vmatpush1.msra.mxu0 0.0
    %667 = vmatprep.subr.mxu0 0.0
    %668 = vmatpush1.msra.mxu0 0.0
    %669 = vmatprep.subr.mxu0 0.0
    %670 = vmatpush1.msra.mxu0 0.0
    %671 = vmatprep.subr.mxu0 0.0
    %672 = vmatpush1.msra.mxu0 0.0
    %673 = vmatprep.subr.mxu0 0.0
    %674 = vmatpush1.msra.mxu0 0.0
    %675 = vmatprep.subr.mxu0 0.0
    %676 = vmatpush1.msra.mxu0 0.0
    %677 = vmatprep.subr.mxu0 0.0
    %678 = vmatpush1.msra.mxu0 0.0
    %679 = vmatprep.subr.mxu0 0.0
    %680 = vmatpush1.msra.mxu0 0.0
    %681 = vmatprep.subr.mxu0 0.0
    %682 = vmatpush1.msra.mxu0 0.0
    %683 = vmatprep.subr.mxu0 0.0
    %684 = vmatpush1.msra.mxu0 0.0
    %685 = vmatprep.subr.mxu0 0.0
    %686 = vmatpush1.msra.mxu0 0.0
    %687 = vmatprep.subr.mxu0 0.0
    %688 = vmatpush1.msra.mxu0 0.0
    %689 = vmatprep.subr.mxu0 0.0
    %690 = vmatpush1.msra.mxu0 0.0
    %691 = vmatprep.subr.mxu0 0.0
    %692 = vmatpush1.msra.mxu0 0.0
    %693 = vmatprep.subr.mxu0 0.0
    %694 = vmatpush1.msra.mxu0 0.0
    %695 = vmatprep.subr.mxu0 0.0
    %696 = vmatpush1.msra.mxu0 0.0
    %697 = vmatprep.subr.mxu0 0.0
    %698 = vmatpush1.msra.mxu0 0.0
    %699 = vmatprep.mubr.f32.mxu0 0.0
    %700 = vmatmul.mubr.f32.gmra.mrb[0].mxu0 %v633
    %v701 = vpop.f32.mrb[0].mxu0
    %v702 = vadd.f32 0.0, %v701
    %v703 = vpop.f32.mrb[0].mxu0
    %704 = vdwg.mxu0
    %v705 = vadd.f32 %v631, %v702
    %v706 = vmul.f32 %v705, %v159
    %v707 = vtanh.pop %v706
    %v708 = vmul.f32 %v707, %v159
    %v709 = vadd.f32 %v708, %v160
    %v711 = vlaneseq
    %v712 = vshrl.u32 %v711, 7
    %v713 = vsub.s32 0, %v712
    %v714 = vrot.slane %v630, %v713
    %715 = vrot.lane.b32.xlu0 %v714, 32
    %v716 = vpop.permute.xlu0 %715
    %v718 = vmul.f32 %v709, %v716
    %720 = vrot.lane.b32.xlu0 %v709, 64
    %v721 = vpop.permute.xlu0 %720
    %v723 = vmul.f32 %v709, %v721
    %725 = vrot.lane.b32.xlu0 %v723, 32
    %v726 = vpop.permute.xlu0 %725
    %v728 = vadd.f32 %v718, %v726
    %v729 = vtanh.pop %v728
    %731 = vrot.lane.b32.xlu0 %v729, 64
    %v732 = vpop.permute.xlu0 %731
    %v734 = vmul.f32 %v709, %v732
    %736 = vrot.lane.b32.xlu0 %v728, 96
    %v737 = vpop.permute.xlu0 %736
    %739 = vst.msk [vmem:[#allocation4] sm:$0x1] %vm161, %v737
    %741 = vrot.lane.b32.xlu0 %v734, 32
    %v742 = vpop.permute.xlu0 %741
    %744 = vst.msk [vmem:[#allocation3] sm:$0x1] %vm161, %v742
    %v745 = vld [vmem:[#allocation3] sm:$0x1]
    %v746 = vld [vmem:[#allocation4] sm:$0x1]
    %v747 = vld [vmem:[#allocation2 + $0x5] sm:$0x1]
    %v749 = vsel %vm167, %v745, 0
    %751 = vmatprep.subr.mxu0 0.0
    %752 = vmatpush1.msra.mxu0 %v150
    %753 = vmatprep.subr.mxu0 0.0
    %754 = vmatpush1.msra.mxu0 %v151
    %755 = vmatprep.subr.mxu0 0.0
    %756 = vmatpush1.msra.mxu0 %v152
    %757 = vmatprep.subr.mxu0 0.0
    %758 = vmatpush1.msra.mxu0 %v153
    %759 = vmatprep.subr.mxu0 0.0
    %760 = vmatpush1.msra.mxu0 0.0
    %761 = vmatprep.subr.mxu0 0.0
    %762 = vmatpush1.msra.mxu0 0.0
    %763 = vmatprep.subr.mxu0 0.0
    %764 = vmatpush1.msra.mxu0 0.0
    %765 = vmatprep.subr.mxu0 0.0
    %766 = vmatpush1.msra.mxu0 0.0
    %767 = vmatprep.subr.mxu0 0.0
    %768 = vmatpush1.msra.mxu0 0.0
    %769 = vmatprep.subr.mxu0 0.0
    %770 = vmatpush1.msra.mxu0 0.0
    %771 = vmatprep.subr.mxu0 0.0
    %772 = vmatpush1.msra.mxu0 0.0
    %773 = vmatprep.subr.mxu0 0.0
    %774 = vmatpush1.msra.mxu0 0.0
    %775 = vmatprep.subr.mxu0 0.0
    %776 = vmatpush1.msra.mxu0 0.0
    %777 = vmatprep.subr.mxu0 0.0
    %778 = vmatpush1.msra.mxu0 0.0
    %779 = vmatprep.subr.mxu0 0.0
    %780 = vmatpush1.msra.mxu0 0.0
    %781 = vmatprep.subr.mxu0 0.0
    %782 = vmatpush1.msra.mxu0 0.0
    %783 = vmatprep.subr.mxu0 0.0
    %784 = vmatpush1.msra.mxu0 0.0
    %785 = vmatprep.subr.mxu0 0.0
    %786 = vmatpush1.msra.mxu0 0.0
    %787 = vmatprep.subr.mxu0 0.0
    %788 = vmatpush1.msra.mxu0 0.0
    %789 = vmatprep.subr.mxu0 0.0
    %790 = vmatpush1.msra.mxu0 0.0
    %791 = vmatprep.subr.mxu0 0.0
    %792 = vmatpush1.msra.mxu0 0.0
    %793 = vmatprep.subr.mxu0 0.0
    %794 = vmatpush1.msra.mxu0 0.0
    %795 = vmatprep.subr.mxu0 0.0
    %796 = vmatpush1.msra.mxu0 0.0
    %797 = vmatprep.subr.mxu0 0.0
    %798 = vmatpush1.msra.mxu0 0.0
    %799 = vmatprep.subr.mxu0 0.0
    %800 = vmatpush1.msra.mxu0 0.0
    %801 = vmatprep.subr.mxu0 0.0
    %802 = vmatpush1.msra.mxu0 0.0
    %803 = vmatprep.subr.mxu0 0.0
    %804 = vmatpush1.msra.mxu0 0.0
    %805 = vmatprep.subr.mxu0 0.0
    %806 = vmatpush1.msra.mxu0 0.0
    %807 = vmatprep.subr.mxu0 0.0
    %808 = vmatpush1.msra.mxu0 0.0
    %809 = vmatprep.subr.mxu0 0.0
    %810 = vmatpush1.msra.mxu0 0.0
    %811 = vmatprep.subr.mxu0 0.0
    %812 = vmatpush1.msra.mxu0 0.0
    %813 = vmatprep.subr.mxu0 0.0
    %814 = vmatpush1.msra.mxu0 0.0
    %815 = vmatprep.mubr.f32.mxu0 0.0
    %816 = vmatmul.mubr.f32.gmra.mrb[0].mxu0 %v749
    %v817 = vpop.f32.mrb[0].mxu0
    %v818 = vadd.f32 0.0, %v817
    %v819 = vpop.f32.mrb[0].mxu0
    %820 = vdwg.mxu0
    %v821 = vadd.f32 %v747, %v818
    %v822 = vmul.f32 %v821, %v159
    %v823 = vtanh.pop %v822
    %v824 = vmul.f32 %v823, %v159
    %v825 = vadd.f32 %v824, %v160
    %v827 = vlaneseq
    %v828 = vshrl.u32 %v827, 7
    %v829 = vsub.s32 0, %v828
    %v830 = vrot.slane %v746, %v829
    %831 = vrot.lane.b32.xlu0 %v830, 32
    %v832 = vpop.permute.xlu0 %831
    %v834 = vmul.f32 %v825, %v832
    %836 = vrot.lane.b32.xlu0 %v825, 64
    %v837 = vpop.permute.xlu0 %836
    %v839 = vmul.f32 %v825, %v837
    %841 = vrot.lane.b32.xlu0 %v839, 32
    %v842 = vpop.permute.xlu0 %841
    %v844 = vadd.f32 %v834, %v842
    %v845 = vtanh.pop %v844
    %847 = vrot.lane.b32.xlu0 %v845, 64
    %v848 = vpop.permute.xlu0 %847
    %v850 = vmul.f32 %v825, %v848
    %852 = vrot.lane.b32.xlu0 %v844, 96
    %v853 = vpop.permute.xlu0 %852
    %855 = vst.msk [vmem:[#allocation4] sm:$0x1] %vm161, %v853
    %857 = vrot.lane.b32.xlu0 %v850, 32
    %v858 = vpop.permute.xlu0 %857
    %860 = vst.msk [vmem:[#allocation3] sm:$0x1] %vm161, %v858
    %v861 = vld [vmem:[#allocation3] sm:$0x1]
    %v862 = vld [vmem:[#allocation4] sm:$0x1]
    %v863 = vld [vmem:[#allocation2 + $0x6] sm:$0x1]
    %v865 = vsel %vm167, %v861, 0
    %867 = vmatprep.subr.mxu0 0.0
    %868 = vmatpush1.msra.mxu0 %v150
    %869 = vmatprep.subr.mxu0 0.0
    %870 = vmatpush1.msra.mxu0 %v151
    %871 = vmatprep.subr.mxu0 0.0
    %872 = vmatpush1.msra.mxu0 %v152
    %873 = vmatprep.subr.mxu0 0.0
    %874 = vmatpush1.msra.mxu0 %v153
    %875 = vmatprep.subr.mxu0 0.0
    %876 = vmatpush1.msra.mxu0 0.0
    %877 = vmatprep.subr.mxu0 0.0
    %878 = vmatpush1.msra.mxu0 0.0
    %879 = vmatprep.subr.mxu0 0.0
    %880 = vmatpush1.msra.mxu0 0.0
    %881 = vmatprep.subr.mxu0 0.0
    %882 = vmatpush1.msra.mxu0 0.0
    %883 = vmatprep.subr.mxu0 0.0
    %884 = vmatpush1.msra.mxu0 0.0
    %885 = vmatprep.subr.mxu0 0.0
    %886 = vmatpush1.msra.mxu0 0.0
    %887 = vmatprep.subr.mxu0 0.0
    %888 = vmatpush1.msra.mxu0 0.0
    %889 = vmatprep.subr.mxu0 0.0
    %890 = vmatpush1.msra.mxu0 0.0
    %891 = vmatprep.subr.mxu0 0.0
    %892 = vmatpush1.msra.mxu0 0.0
    %893 = vmatprep.subr.mxu0 0.0
    %894 = vmatpush1.msra.mxu0 0.0
    %895 = vmatprep.subr.mxu0 0.0
    %896 = vmatpush1.msra.mxu0 0.0
    %897 = vmatprep.subr.mxu0 0.0
    %898 = vmatpush1.msra.mxu0 0.0
    %899 = vmatprep.subr.mxu0 0.0
    %900 = vmatpush1.msra.mxu0 0.0
    %901 = vmatprep.subr.mxu0 0.0
    %902 = vmatpush1.msra.mxu0 0.0
    %903 = vmatprep.subr.mxu0 0.0
    %904 = vmatpush1.msra.mxu0 0.0
    %905 = vmatprep.subr.mxu0 0.0
    %906 = vmatpush1.msra.mxu0 0.0
    %907 = vmatprep.subr.mxu0 0.0
    %908 = vmatpush1.msra.mxu0 0.0
    %909 = vmatprep.subr.mxu0 0.0
    %910 = vmatpush1.msra.mxu0 0.0
    %911 = vmatprep.subr.mxu0 0.0
    %912 = vmatpush1.msra.mxu0 0.0
    %913 = vmatprep.subr.mxu0 0.0
    %914 = vmatpush1.msra.mxu0 0.0
    %915 = vmatprep.subr.mxu0 0.0
    %916 = vmatpush1.msra.mxu0 0.0
    %917 = vmatprep.subr.mxu0 0.0
    %918 = vmatpush1.msra.mxu0 0.0
    %919 = vmatprep.subr.mxu0 0.0
    %920 = vmatpush1.msra.mxu0 0.0
    %921 = vmatprep.subr.mxu0 0.0
    %922 = vmatpush1.msra.mxu0 0.0
    %923 = vmatprep.subr.mxu0 0.0
    %924 = vmatpush1.msra.mxu0 0.0
    %925 = vmatprep.subr.mxu0 0.0
    %926 = vmatpush1.msra.mxu0 0.0
    %927 = vmatprep.subr.mxu0 0.0
    %928 = vmatpush1.msra.mxu0 0.0
    %929 = vmatprep.subr.mxu0 0.0
    %930 = vmatpush1.msra.mxu0 0.0
    %931 = vmatprep.mubr.f32.mxu0 0.0
    %932 = vmatmul.mubr.f32.gmra.mrb[0].mxu0 %v865
    %v933 = vpop.f32.mrb[0].mxu0
    %v934 = vadd.f32 0.0, %v933
    %v935 = vpop.f32.mrb[0].mxu0
    %936 = vdwg.mxu0
    %v937 = vadd.f32 %v863, %v934
    %v938 = vmul.f32 %v937, %v159
    %v939 = vtanh.pop %v938
    %v940 = vmul.f32 %v939, %v159
    %v941 = vadd.f32 %v940, %v160
    %v943 = vlaneseq
    %v944 = vshrl.u32 %v943, 7
    %v945 = vsub.s32 0, %v944
    %v946 = vrot.slane %v862, %v945
    %947 = vrot.lane.b32.xlu0 %v946, 32
    %v948 = vpop.permute.xlu0 %947
    %v950 = vmul.f32 %v941, %v948
    %952 = vrot.lane.b32.xlu0 %v941, 64
    %v953 = vpop.permute.xlu0 %952
    %v955 = vmul.f32 %v941, %v953
    %957 = vrot.lane.b32.xlu0 %v955, 32
    %v958 = vpop.permute.xlu0 %957
    %v960 = vadd.f32 %v950, %v958
    %v961 = vtanh.pop %v960
    %963 = vrot.lane.b32.xlu0 %v961, 64
    %v964 = vpop.permute.xlu0 %963
    %v966 = vmul.f32 %v941, %v964
    %968 = vrot.lane.b32.xlu0 %v960, 96
    %v969 = vpop.permute.xlu0 %968
    %971 = vst.msk [vmem:[#allocation4] sm:$0x1] %vm161, %v969
    %973 = vrot.lane.b32.xlu0 %v966, 32
    %v974 = vpop.permute.xlu0 %973
    %976 = vst.msk [vmem:[#allocation3] sm:$0x1] %vm161, %v974
    %v977 = vld [vmem:[#allocation3] sm:$0x1]
    %v978 = vld [vmem:[#allocation4] sm:$0x1]
    %v979 = vld [vmem:[#allocation2 + $0x7] sm:$0x1]
    %v981 = vsel %vm167, %v977, 0
    %983 = vmatprep.subr.mxu0 0.0
    %984 = vmatpush1.msra.mxu0 %v150
    %985 = vmatprep.subr.mxu0 0.0
    %986 = vmatpush1.msra.mxu0 %v151
    %987 = vmatprep.subr.mxu0 0.0
    %988 = vmatpush1.msra.mxu0 %v152
    %989 = vmatprep.subr.mxu0 0.0
    %990 = vmatpush1.msra.mxu0 %v153
    %991 = vmatprep.subr.mxu0 0.0
    %992 = vmatpush1.msra.mxu0 0.0
    %993 = vmatprep.subr.mxu0 0.0
    %994 = vmatpush1.msra.mxu0 0.0
    %995 = vmatprep.subr.mxu0 0.0
    %996 = vmatpush1.msra.mxu0 0.0
    %997 = vmatprep.subr.mxu0 0.0
    %998 = vmatpush1.msra.mxu0 0.0
    %999 = vmatprep.subr.mxu0 0.0
    %1000 = vmatpush1.msra.mxu0 0.0
    %1001 = vmatprep.subr.mxu0 0.0
    %1002 = vmatpush1.msra.mxu0 0.0
    %1003 = vmatprep.subr.mxu0 0.0
    %1004 = vmatpush1.msra.mxu0 0.0
    %1005 = vmatprep.subr.mxu0 0.0
    %1006 = vmatpush1.msra.mxu0 0.0
    %1007 = vmatprep.subr.mxu0 0.0
    %1008 = vmatpush1.msra.mxu0 0.0
    %1009 = vmatprep.subr.mxu0 0.0
    %1010 = vmatpush1.msra.mxu0 0.0
    %1011 = vmatprep.subr.mxu0 0.0
    %1012 = vmatpush1.msra.mxu0 0.0
    %1013 = vmatprep.subr.mxu0 0.0
    %1014 = vmatpush1.msra.mxu0 0.0
    %1015 = vmatprep.subr.mxu0 0.0
    %1016 = vmatpush1.msra.mxu0 0.0
    %1017 = vmatprep.subr.mxu0 0.0
    %1018 = vmatpush1.msra.mxu0 0.0
    %1019 = vmatprep.subr.mxu0 0.0
    %1020 = vmatpush1.msra.mxu0 0.0
    %1021 = vmatprep.subr.mxu0 0.0
    %1022 = vmatpush1.msra.mxu0 0.0
    %1023 = vmatprep.subr.mxu0 0.0
    %1024 = vmatpush1.msra.mxu0 0.0
    %1025 = vmatprep.subr.mxu0 0.0
    %1026 = vmatpush1.msra.mxu0 0.0
    %1027 = vmatprep.subr.mxu0 0.0
    %1028 = vmatpush1.msra.mxu0 0.0
    %1029 = vmatprep.subr.mxu0 0.0
    %1030 = vmatpush1.msra.mxu0 0.0
    %1031 = vmatprep.subr.mxu0 0.0
    %1032 = vmatpush1.msra.mxu0 0.0
    %1033 = vmatprep.subr.mxu0 0.0
    %1034 = vmatpush1.msra.mxu0 0.0
    %1035 = vmatprep.subr.mxu0 0.0
    %1036 = vmatpush1.msra.mxu0 0.0
    %1037 = vmatprep.subr.mxu0 0.0
    %1038 = vmatpush1.msra.mxu0 0.0
    %1039 = vmatprep.subr.mxu0 0.0
    %1040 = vmatpush1.msra.mxu0 0.0
    %1041 = vmatprep.subr.mxu0 0.0
    %1042 = vmatpush1.msra.mxu0 0.0
    %1043 = vmatprep.subr.mxu0 0.0
    %1044 = vmatpush1.msra.mxu0 0.0
    %1045 = vmatprep.subr.mxu0 0.0
    %1046 = vmatpush1.msra.mxu0 0.0
    %1047 = vmatprep.mubr.f32.mxu0 0.0
    %1048 = vmatmul.mubr.f32.gmra.mrb[0].mxu0 %v981
    %v1049 = vpop.f32.mrb[0].mxu0
    %v1050 = vadd.f32 0.0, %v1049
    %v1051 = vpop.f32.mrb[0].mxu0
    %1052 = vdwg.mxu0
    %v1053 = vadd.f32 %v979, %v1050
    %v1054 = vmul.f32 %v1053, %v159
    %v1055 = vtanh.pop %v1054
    %v1056 = vmul.f32 %v1055, %v159
    %v1057 = vadd.f32 %v1056, %v160
    %v1059 = vlaneseq
    %v1060 = vshrl.u32 %v1059, 7
    %v1061 = vsub.s32 0, %v1060
    %v1062 = vrot.slane %v978, %v1061
    %1063 = vrot.lane.b32.xlu0 %v1062, 32
    %v1064 = vpop.permute.xlu0 %1063
    %v1066 = vmul.f32 %v1057, %v1064
    %1068 = vrot.lane.b32.xlu0 %v1057, 64
    %v1069 = vpop.permute.xlu0 %1068
    %v1071 = vmul.f32 %v1057, %v1069
    %1073 = vrot.lane.b32.xlu0 %v1071, 32
    %v1074 = vpop.permute.xlu0 %1073
    %v1076 = vadd.f32 %v1066, %v1074
    %v1077 = vtanh.pop %v1076
    %1079 = vrot.lane.b32.xlu0 %v1077, 64
    %v1080 = vpop.permute.xlu0 %1079
    %v1082 = vmul.f32 %v1057, %v1080
    %1084 = vrot.lane.b32.xlu0 %v1076, 96
    %v1085 = vpop.permute.xlu0 %1084
    %1087 = vst.msk [vmem:[#allocation4] sm:$0x1] %vm161, %v1085
    %1089 = vrot.lane.b32.xlu0 %v1082, 32
    %v1090 = vpop.permute.xlu0 %1089
    %1092 = vst.msk [vmem:[#allocation3] sm:$0x1] %vm161, %v1090
    %v1093 = vld [vmem:[#allocation3] sm:$0x1]
    %v1094 = vld [vmem:[%s4] sm:$0x1]
    %v1095 = vmul.f32 %v1093, %v1094
    %v1096 = vsel %vm161, %v1095, 0.0
    %1097 = vadd.xlane.f32.xlu0 %v1096
    %v1098 = vpop.xlane.xlu0 %1097
    %v1099 = vld [vmem:[#allocation5] sm:$0x1]
    %v1100 = vadd.f32 %v1098, %v1099
    %vm1101 = vcmask 0
    %1102 = vst.msk [vmem:[#allocation12] sm:$0x1] %vm1101, %v1100
    // Predicated region
    $region38: #{tpu_custom_call.1} parent=1 // pred_check
      _
    $region39: #{tpu_custom_call.1} parent=1 // pred_check_branch
      %1104 = sbr.rel (0) target = $region41
    $region40: #{tpu_custom_call.1} parent=1 // pred_region
      %s1106 = ssub.s32 16, 16
      %1107 = vsyncadd [#allocation8], %s1106
      %s1109 = sshll.u32 [#allocation12], 4
      %s1110 = int_to_ptr.vmem [resolvable:$true] %s1109
      %1112 = dma.vmem_to_hbm [thread:$0]  %s1110, 16, %s6, [#allocation8]
    $region41: #{tpu_custom_call.1} parent=1 // pred_fallthru
      _
    // Predicated region
    $region42: #{tpu_custom_call.1} parent=1 // pred_check
      _
    $region43: #{tpu_custom_call.1} parent=1 // pred_check_branch
      %1114 = sbr.rel (0) target = $region45
    $region44: #{tpu_custom_call.1} parent=1 // pred_region
      %1115 = dma.done [#allocation8], 16
    $region45: #{tpu_custom_call.1} parent=1 // pred_fallthru
      _
    %1116 = vsyncpa [#allocation7], 1
    %1117 = vsyncpa [#allocation10], 1
    %1118 = vsyncpa [#allocation8], 1

</llo_original>
